<compile_context>
chip_gen: v7x
topology: tpu7x:2x2x1
jax: 0.10.0
libtpu: 0.0.40
codegen_flags: <defaults>
</compile_context>

<pallas_src>
import functools

import jax
import jax.numpy as jnp
import numpy as np
from jax import lax
from jax.experimental import pallas as pl
from jax.experimental.pallas import tpu as pltpu

HIDDEN_DIM = 128
INPUT_DIM = 1
OUTPUT_DIM = 1
OUTPUT_WINDOW = 5


def _round_up(x, m):
    return ((x + m - 1) // m) * m


def _make_lstm_kernel(T_total, Tt, H, unroll):
    """Build the LSTM recurrence kernel. T_total/Tt/H/unroll are static ints."""
    G = 4 * H
    full_tiles = (T_total % Tt == 0)
    rem = T_total % Tt  # valid steps in the last time tile (when not full)

    def kernel(x_ref, whh_ref, wx_ref, h_out_ref, h_sc, c_sc):
        # x_ref   : (Tt, Bt, Dp)  raw input, augmented with a constant-1 bias col
        # whh_ref : (H, G)        W_hh^T, resident in VMEM (constant index map)
        # wx_ref  : (Dp, G)       stacked [W_ih^T ; b_ih+b_hh ; 0...], resident
        # h_out   : (Bt, H)       last hidden state for this batch tile
        # h_sc/c_sc: (Bt, H)      recurrent state carried across time tiles
        t_blk = pl.program_id(1)
        n_t = pl.num_programs(1)

        @pl.when(t_blk == 0)
        def _():
            h_sc[...] = jnp.zeros_like(h_sc)
            c_sc[...] = jnp.zeros_like(c_sc)

        # Loop-invariant weights loaded once per tile.
        # TODO(synk): keep W_hh^T staged in the MXU across the T loop via
        # pltpu.matmul_push_rhs / matmul_acc_lhs once f32 support is confirmed.
        whh = whh_ref[...]
        wx = wx_ref[...]

        if not full_tiles:
            valid = jnp.where(t_blk == n_t - 1, rem, Tt)

        def step(t, carry):
            h, c = carry
            # Fused input projection (bias folded into wx via the ones column);
            # independent of h so it sits off the serial h_t -> h_{t+1} chain.
            xg = jnp.dot(x_ref[t], wx, preferred_element_type=jnp.float32)
            gates = xg + jnp.dot(h, whh, preferred_element_type=jnp.float32)
            i_g = jax.nn.sigmoid(gates[:, 0:H])
            f_g = jax.nn.sigmoid(gates[:, H:2 * H])
            g_g = jnp.tanh(gates[:, 2 * H:3 * H])
            o_g = jax.nn.sigmoid(gates[:, 3 * H:4 * H])
            c_new = f_g * c + i_g * g_g
            h_new = o_g * jnp.tanh(c_new)
            if full_tiles:
                return h_new, c_new
            keep = t < valid  # mask out zero-padded trailing timesteps
            return (jnp.where(keep, h_new, h), jnp.where(keep, c_new, c))

        # (h, c) carried as fori_loop carry (vregs) within the tile; scratch is
        # only touched once per tile to persist state across time tiles.
        h_f, c_f = lax.fori_loop(0, Tt, step, (h_sc[...], c_sc[...]),
                                 unroll=unroll)
        h_sc[...] = h_f
        c_sc[...] = c_f

        @pl.when(t_blk == n_t - 1)
        def _():
            h_out_ref[...] = h_f

    return kernel


@functools.partial(jax.jit, static_argnames=("output_window", "output_dim"))
def lstm_model_forward(x, w_ih_t, w_hh_t, b_sum, w_fc_t, b_fc,
                       *, output_window, output_dim):
    """Forward pass of LSTMModel. x: (B, T, D) float32 (batch_first, like PyTorch)."""
    B, T, D = x.shape
    H = w_hh_t.shape[0]
    G = 4 * H

    # --- static tiling choices ------------------------------------------------
    # Batch: pad to a sublane multiple; <=64 rows per tile keeps the (h, c)
    # vreg carry cheap, larger batches shard over a 'parallel' grid axis
    # (picked up by the two TensorCores on v7x).
    Bt = min(_round_up(B, 8), 64)
    Bp = _round_up(_round_up(B, 8), Bt)
    nB = Bp // Bt
    # Time: stream x in (Tt, Bt, Dp) tiles -> DMA/compute overlap, VMEM-safe
    # for any T (no full-sequence slab parked in VMEM).
    Tt = min(T, 128)
    Tp = _round_up(T, Tt)
    nT = Tp // Tt
    unroll = True if Tt <= 16 else 8
    # Augmented input feature dim: [x (D cols) | 1 (bias col) | zero pad] -> mult of 8.
    Dp = max(8, _round_up(D + 1, 8))

    # --- input prep: stream RAW x (plus ones column), NOT x @ W_ih^T ----------
    x_tbd = jnp.transpose(x, (1, 0, 2)).astype(jnp.float32)        # (T, B, D)
    x_aug = jnp.zeros((Tp, Bp, Dp), jnp.float32)
    x_aug = x_aug.at[:T, :B, :D].set(x_tbd)
    x_aug = x_aug.at[:T, :, D].set(1.0)                            # bias column

    # Stacked input-side weight: rows 0..D-1 = W_ih^T, row D = (b_ih + b_hh).
    w_x = jnp.zeros((Dp, G), jnp.float32)
    w_x = w_x.at[:D, :].set(w_ih_t)
    w_x = w_x.at[D, :].set(b_sum.reshape(-1))

    kernel = _make_lstm_kernel(T, Tt, H, unroll)

    h_last = pl.pallas_call(
        kernel,
        out_shape=jax.ShapeDtypeStruct((Bp, H), jnp.float32),
        grid_spec=pltpu.PrefetchScalarGridSpec(
            num_scalar_prefetch=0,
            grid=(nB, nT),
            in_specs=[
                pl.BlockSpec((Tt, Bt, Dp), lambda b, t: (t, b, 0)),   # x_aug
                pl.BlockSpec((H, G), lambda b, t: (0, 0)),            # W_hh^T
                pl.BlockSpec((Dp, G), lambda b, t: (0, 0)),           # W_x (+bias)
            ],
            out_specs=pl.BlockSpec((Bt, H), lambda b, t: (b, 0)),     # h_last
            scratch_shapes=[
                pltpu.VMEM((Bt, H), jnp.float32),  # h (persists across t tiles)
                pltpu.VMEM((Bt, H), jnp.float32),  # c
            ],
        ),
        compiler_params=pltpu.CompilerParams(
            dimension_semantics=("parallel", "arbitrary")),
    )(x_aug, w_hh_t, w_x)

    # Tiny FC head (H -> output_window*output_dim) as plain XLA, real rows only.
    out = h_last[:B] @ w_fc_t + b_fc                                # (B, OWD)
    return out.reshape(B, output_window, output_dim)


def reference_forward(x, w_ih_t, w_hh_t, b_sum, w_fc_t, b_fc,
                      output_window, output_dim):
    """Pure-JAX reference (mirrors torch.nn.LSTM + Linear semantics)."""
    B, T, D = x.shape
    H = w_hh_t.shape[0]

    def step(carry, x_t):
        h, c = carry
        gates = x_t @ w_ih_t + h @ w_hh_t + b_sum[0]
        i = jax.nn.sigmoid(gates[:, 0:H])
        f = jax.nn.sigmoid(gates[:, H:2 * H])
        g = jnp.tanh(gates[:, 2 * H:3 * H])
        o = jax.nn.sigmoid(gates[:, 3 * H:4 * H])
        c = f * c + i * g
        h = o * jnp.tanh(c)
        return (h, c), None

    h0 = jnp.zeros((B, H), jnp.float32)
    c0 = jnp.zeros((B, H), jnp.float32)
    (h_last, _), _ = jax.lax.scan(step, (h0, c0), jnp.transpose(x, (1, 0, 2)))
    out = h_last @ w_fc_t + b_fc[0]
    return out.reshape(B, output_window, output_dim)


def init_params(key, input_dim, hidden_dim, output_dim, output_window):
    """Deterministic PyTorch-style uniform init U(-1/sqrt(H), 1/sqrt(H))."""
    ks = jax.random.split(key, 6)
    bound = 1.0 / np.sqrt(hidden_dim)
    u = lambda k, shape: jax.random.uniform(k, shape, jnp.float32, -bound, bound)

    w_ih = u(ks[0], (4 * hidden_dim, input_dim))   # PyTorch weight_ih_l0
    w_hh = u(ks[1], (4 * hidden_dim, hidden_dim))  # PyTorch weight_hh_l0
    b_ih = u(ks[2], (4 * hidden_dim,))
    b_hh = u(ks[3], (4 * hidden_dim,))
    owd = output_dim * output_window
    w_fc = u(ks[4], (owd, hidden_dim))             # nn.Linear weight
    b_fc = u(ks[5], (owd,))

    return dict(
        w_ih_t=w_ih.T,                              # (D, 4H)
        w_hh_t=w_hh.T,                              # (H, 4H)
        b_sum=(b_ih + b_hh).reshape(1, -1),         # (1, 4H)
        w_fc_t=w_fc.T,                              # (H, OWD)
        b_fc=b_fc.reshape(1, -1),                   # (1, OWD)
    )


if __name__ == "__main__":
    key = jax.random.PRNGKey(0)
    k_x, k_p = jax.random.split(key)

    B, T = 4, 8
    x = jax.random.normal(k_x, (B, T, INPUT_DIM), dtype=jnp.float32)

    params = init_params(k_p, INPUT_DIM, HIDDEN_DIM, OUTPUT_DIM, OUTPUT_WINDOW)

    out = lstm_model_forward(
        x, params["w_ih_t"], params["w_hh_t"], params["b_sum"],
        params["w_fc_t"], params["b_fc"],
        output_window=OUTPUT_WINDOW, output_dim=OUTPUT_DIM)
    out = jax.block_until_ready(out)

    ref = reference_forward(
        x, params["w_ih_t"], params["w_hh_t"], params["b_sum"],
        params["w_fc_t"], params["b_fc"], OUTPUT_WINDOW, OUTPUT_DIM)

    assert out.shape == (B, OUTPUT_WINDOW, OUTPUT_DIM), out.shape
    np.testing.assert_allclose(np.asarray(out), np.asarray(ref),
                               rtol=1e-5, atol=1e-5)
    print("KERNEL_OK")
</pallas_src>

<mosaic_0001>
module attributes {stable_mosaic.version = 11 : i64} {
  func.func @kernel(%arg0: i32, %arg1: i32, %arg2: memref<8x8x8xf32, #tpu.memory_space<vmem>>, %arg3: memref<128x512xf32, #tpu.memory_space<vmem>>, %arg4: memref<8x512xf32, #tpu.memory_space<vmem>>, %arg5: memref<8x128xf32, #tpu.memory_space<vmem>>, %arg6: memref<8x128xf32, #tpu.memory_space<vmem>>, %arg7: memref<8x128xf32, #tpu.memory_space<vmem>>) attributes {dimension_semantics = [#tpu.dimension_semantics<parallel>, #tpu.dimension_semantics<arbitrary>], iteration_bounds = array<i64: 1, 1>, scalar_prefetch = 0 : i64, scratch_operands = 2 : i64, tpu.core_type = #tpu.core_type<tc>, window_params = [{transform_indices = @transform_0, window_bounds = array<i64: 8, 8, 8>}, {pipeline_mode = #tpu.pipeline_mode<synchronous>, transform_indices = @transform_1, window_bounds = array<i64: 128, 512>}, {pipeline_mode = #tpu.pipeline_mode<synchronous>, transform_indices = @transform_2, window_bounds = array<i64: 8, 512>}, {transform_indices = @transform_3, window_bounds = array<i64: 8, 128>}]} {
    %c0_i32 = arith.constant 0 : i32
    %0 = arith.cmpi eq, %arg1, %c0_i32 : i32
    %1 = arith.extui %0 : i1 to i32
    %c0_i32_0 = arith.constant 0 : i32
    %2 = arith.cmpi ne, %1, %c0_i32_0 : i32
    scf.if %2 {
      %cst_70 = arith.constant 0.000000e+00 : f32
      %260 = vector.broadcast %cst_70 : f32 to vector<8x128xf32>
      %c0_71 = arith.constant 0 : index
      %c0_72 = arith.constant 0 : index
      %261 = vector.load %arg6[%c0_71, %c0_72] : memref<8x128xf32, #tpu.memory_space<vmem>>, vector<8x128xf32>
      tpu.vector_store %arg6[%c0_71, %c0_72], %260 {strides = array<i32>} : memref<8x128xf32, #tpu.memory_space<vmem>>, vector<8x128xf32>,
      %cst_73 = arith.constant 0.000000e+00 : f32
      %262 = vector.broadcast %cst_73 : f32 to vector<8x128xf32>
      %c0_74 = arith.constant 0 : index
      %c0_75 = arith.constant 0 : index
      %263 = vector.load %arg7[%c0_74, %c0_75] : memref<8x128xf32, #tpu.memory_space<vmem>>, vector<8x128xf32>
      tpu.vector_store %arg7[%c0_74, %c0_75], %262 {strides = array<i32>} : memref<8x128xf32, #tpu.memory_space<vmem>>, vector<8x128xf32>,
    } else {
    }
    %c0 = arith.constant 0 : index
    %c0_1 = arith.constant 0 : index
    %3 = vector.load %arg3[%c0, %c0_1] : memref<128x512xf32, #tpu.memory_space<vmem>>, vector<128x512xf32>
    %c0_2 = arith.constant 0 : index
    %c0_3 = arith.constant 0 : index
    %4 = vector.load %arg4[%c0_2, %c0_3] : memref<8x512xf32, #tpu.memory_space<vmem>>, vector<8x512xf32>
    %c0_4 = arith.constant 0 : index
    %c0_5 = arith.constant 0 : index
    %5 = vector.load %arg6[%c0_4, %c0_5] : memref<8x128xf32, #tpu.memory_space<vmem>>, vector<8x128xf32>
    %c0_6 = arith.constant 0 : index
    %c0_7 = arith.constant 0 : index
    %6 = vector.load %arg7[%c0_6, %c0_7] : memref<8x128xf32, #tpu.memory_space<vmem>>, vector<8x128xf32>
    %c0_i32_8 = arith.constant 0 : i32
    %7 = arith.index_cast %c0_i32_8 : i32 to index
    %c0_9 = arith.constant 0 : index
    %c0_10 = arith.constant 0 : index
    %8 = vector.load %arg2[%7, %c0_9, %c0_10] : memref<8x8x8xf32, #tpu.memory_space<vmem>>, vector<1x8x8xf32>
    %9 = vector.shape_cast %8 : vector<1x8x8xf32> to vector<8x8xf32>
    %cst = arith.constant dense<0.000000e+00> : vector<8x512xf32>
    %10 = tpu.matmul %9, %4, %cst {dimension_numbers = #tpu.dot_dimension_numbers<[1], [0], [0], [1], [0, 0, 1, 1], [], []>} : vector<8x8xf32>, vector<8x512xf32>, vector<8x512xf32> -> vector<8x512xf32>
    %cst_11 = arith.constant dense<0.000000e+00> : vector<8x512xf32>
    %11 = tpu.matmul %5, %3, %cst_11 {dimension_numbers = #tpu.dot_dimension_numbers<[1], [0], [0], [1], [0, 0, 1, 1], [], []>} : vector<8x128xf32>, vector<128x512xf32>, vector<8x512xf32> -> vector<8x512xf32>
    %12 = arith.addf %10, %11 : vector<8x512xf32>
    %13 = vector.extract_strided_slice %12 {offsets = [0, 0], sizes = [8, 128], strides = [1, 1]} : vector<8x512xf32> to vector<8x128xf32>
    %14 = arith.negf %13 : vector<8x128xf32>
    %15 = math.exp %14 : vector<8x128xf32>
    %cst_12 = arith.constant 1.000000e+00 : f32
    %16 = vector.broadcast %cst_12 : f32 to vector<8x128xf32>
    %17 = arith.addf %16, %15 : vector<8x128xf32>
    %18 = arith.divf %16, %17 : vector<8x128xf32>
    %19 = vector.extract_strided_slice %12 {offsets = [0, 128], sizes = [8, 128], strides = [1, 1]} : vector<8x512xf32> to vector<8x128xf32>
    %20 = arith.negf %19 : vector<8x128xf32>
    %21 = math.exp %20 : vector<8x128xf32>
    %cst_13 = arith.constant 1.000000e+00 : f32
    %22 = vector.broadcast %cst_13 : f32 to vector<8x128xf32>
    %23 = arith.addf %22, %21 : vector<8x128xf32>
    %24 = arith.divf %22, %23 : vector<8x128xf32>
    %25 = vector.extract_strided_slice %12 {offsets = [0, 256], sizes = [8, 128], strides = [1, 1]} : vector<8x512xf32> to vector<8x128xf32>
    %26 = math.tanh %25 : vector<8x128xf32>
    %27 = vector.extract_strided_slice %12 {offsets = [0, 384], sizes = [8, 128], strides = [1, 1]} : vector<8x512xf32> to vector<8x128xf32>
    %28 = arith.negf %27 : vector<8x128xf32>
    %29 = math.exp %28 : vector<8x128xf32>
    %cst_14 = arith.constant 1.000000e+00 : f32
    %30 = vector.broadcast %cst_14 : f32 to vector<8x128xf32>
    %31 = arith.addf %30, %29 : vector<8x128xf32>
    %32 = arith.divf %30, %31 : vector<8x128xf32>
    %33 = arith.mulf %24, %6 : vector<8x128xf32>
    %34 = arith.mulf %18, %26 : vector<8x128xf32>
    %35 = arith.addf %33, %34 : vector<8x128xf32>
    %36 = math.tanh %35 : vector<8x128xf32>
    %37 = arith.mulf %32, %36 : vector<8x128xf32>
    %c1_i32 = arith.constant 1 : i32
    %38 = arith.index_cast %c1_i32 : i32 to index
    %c0_15 = arith.constant 0 : index
    %c0_16 = arith.constant 0 : index
    %39 = vector.load %arg2[%38, %c0_15, %c0_16] : memref<8x8x8xf32, #tpu.memory_space<vmem>>, vector<1x8x8xf32>
    %40 = vector.shape_cast %39 : vector<1x8x8xf32> to vector<8x8xf32>
    %cst_17 = arith.constant dense<0.000000e+00> : vector<8x512xf32>
    %41 = tpu.matmul %40, %4, %cst_17 {dimension_numbers = #tpu.dot_dimension_numbers<[1], [0], [0], [1], [0, 0, 1, 1], [], []>} : vector<8x8xf32>, vector<8x512xf32>, vector<8x512xf32> -> vector<8x512xf32>
    %cst_18 = arith.constant dense<0.000000e+00> : vector<8x512xf32>
    %42 = tpu.matmul %37, %3, %cst_18 {dimension_numbers = #tpu.dot_dimension_numbers<[1], [0], [0], [1], [0, 0, 1, 1], [], []>} : vector<8x128xf32>, vector<128x512xf32>, vector<8x512xf32> -> vector<8x512xf32>
    %43 = arith.addf %41, %42 : vector<8x512xf32>
    %44 = vector.extract_strided_slice %43 {offsets = [0, 0], sizes = [8, 128], strides = [1, 1]} : vector<8x512xf32> to vector<8x128xf32>
    %45 = arith.negf %44 : vector<8x128xf32>
    %46 = math.exp %45 : vector<8x128xf32>
    %cst_19 = arith.constant 1.000000e+00 : f32
    %47 = vector.broadcast %cst_19 : f32 to vector<8x128xf32>
    %48 = arith.addf %47, %46 : vector<8x128xf32>
    %49 = arith.divf %47, %48 : vector<8x128xf32>
    %50 = vector.extract_strided_slice %43 {offsets = [0, 128], sizes = [8, 128], strides = [1, 1]} : vector<8x512xf32> to vector<8x128xf32>
    %51 = arith.negf %50 : vector<8x128xf32>
    %52 = math.exp %51 : vector<8x128xf32>
    %cst_20 = arith.constant 1.000000e+00 : f32
    %53 = vector.broadcast %cst_20 : f32 to vector<8x128xf32>
    %54 = arith.addf %53, %52 : vector<8x128xf32>
    %55 = arith.divf %53, %54 : vector<8x128xf32>
    %56 = vector.extract_strided_slice %43 {offsets = [0, 256], sizes = [8, 128], strides = [1, 1]} : vector<8x512xf32> to vector<8x128xf32>
    %57 = math.tanh %56 : vector<8x128xf32>
    %58 = vector.extract_strided_slice %43 {offsets = [0, 384], sizes = [8, 128], strides = [1, 1]} : vector<8x512xf32> to vector<8x128xf32>
    %59 = arith.negf %58 : vector<8x128xf32>
    %60 = math.exp %59 : vector<8x128xf32>
    %cst_21 = arith.constant 1.000000e+00 : f32
    %61 = vector.broadcast %cst_21 : f32 to vector<8x128xf32>
    %62 = arith.addf %61, %60 : vector<8x128xf32>
    %63 = arith.divf %61, %62 : vector<8x128xf32>
    %64 = arith.mulf %55, %35 : vector<8x128xf32>
    %65 = arith.mulf %49, %57 : vector<8x128xf32>
    %66 = arith.addf %64, %65 : vector<8x128xf32>
    %67 = math.tanh %66 : vector<8x128xf32>
    %68 = arith.mulf %63, %67 : vector<8x128xf32>
    %c2_i32 = arith.constant 2 : i32
    %69 = arith.index_cast %c2_i32 : i32 to index
    %c0_22 = arith.constant 0 : index
    %c0_23 = arith.constant 0 : index
    %70 = vector.load %arg2[%69, %c0_22, %c0_23] : memref<8x8x8xf32, #tpu.memory_space<vmem>>, vector<1x8x8xf32>
    %71 = vector.shape_cast %70 : vector<1x8x8xf32> to vector<8x8xf32>
    %cst_24 = arith.constant dense<0.000000e+00> : vector<8x512xf32>
    %72 = tpu.matmul %71, %4, %cst_24 {dimension_numbers = #tpu.dot_dimension_numbers<[1], [0], [0], [1], [0, 0, 1, 1], [], []>} : vector<8x8xf32>, vector<8x512xf32>, vector<8x512xf32> -> vector<8x512xf32>
    %cst_25 = arith.constant dense<0.000000e+00> : vector<8x512xf32>
    %73 = tpu.matmul %68, %3, %cst_25 {dimension_numbers = #tpu.dot_dimension_numbers<[1], [0], [0], [1], [0, 0, 1, 1], [], []>} : vector<8x128xf32>, vector<128x512xf32>, vector<8x512xf32> -> vector<8x512xf32>
    %74 = arith.addf %72, %73 : vector<8x512xf32>
    %75 = vector.extract_strided_slice %74 {offsets = [0, 0], sizes = [8, 128], strides = [1, 1]} : vector<8x512xf32> to vector<8x128xf32>
    %76 = arith.negf %75 : vector<8x128xf32>
    %77 = math.exp %76 : vector<8x128xf32>
    %cst_26 = arith.constant 1.000000e+00 : f32
    %78 = vector.broadcast %cst_26 : f32 to vector<8x128xf32>
    %79 = arith.addf %78, %77 : vector<8x128xf32>
    %80 = arith.divf %78, %79 : vector<8x128xf32>
    %81 = vector.extract_strided_slice %74 {offsets = [0, 128], sizes = [8, 128], strides = [1, 1]} : vector<8x512xf32> to vector<8x128xf32>
    %82 = arith.negf %81 : vector<8x128xf32>
    %83 = math.exp %82 : vector<8x128xf32>
    %cst_27 = arith.constant 1.000000e+00 : f32
    %84 = vector.broadcast %cst_27 : f32 to vector<8x128xf32>
    %85 = arith.addf %84, %83 : vector<8x128xf32>
    %86 = arith.divf %84, %85 : vector<8x128xf32>
    %87 = vector.extract_strided_slice %74 {offsets = [0, 256], sizes = [8, 128], strides = [1, 1]} : vector<8x512xf32> to vector<8x128xf32>
    %88 = math.tanh %87 : vector<8x128xf32>
    %89 = vector.extract_strided_slice %74 {offsets = [0, 384], sizes = [8, 128], strides = [1, 1]} : vector<8x512xf32> to vector<8x128xf32>
    %90 = arith.negf %89 : vector<8x128xf32>
    %91 = math.exp %90 : vector<8x128xf32>
    %cst_28 = arith.constant 1.000000e+00 : f32
    %92 = vector.broadcast %cst_28 : f32 to vector<8x128xf32>
    %93 = arith.addf %92, %91 : vector<8x128xf32>
    %94 = arith.divf %92, %93 : vector<8x128xf32>
    %95 = arith.mulf %86, %66 : vector<8x128xf32>
    %96 = arith.mulf %80, %88 : vector<8x128xf32>
    %97 = arith.addf %95, %96 : vector<8x128xf32>
    %98 = math.tanh %97 : vector<8x128xf32>
    %99 = arith.mulf %94, %98 : vector<8x128xf32>
    %c3_i32 = arith.constant 3 : i32
    %100 = arith.index_cast %c3_i32 : i32 to index
    %c0_29 = arith.constant 0 : index
    %c0_30 = arith.constant 0 : index
    %101 = vector.load %arg2[%100, %c0_29, %c0_30] : memref<8x8x8xf32, #tpu.memory_space<vmem>>, vector<1x8x8xf32>
    %102 = vector.shape_cast %101 : vector<1x8x8xf32> to vector<8x8xf32>
    %cst_31 = arith.constant dense<0.000000e+00> : vector<8x512xf32>
    %103 = tpu.matmul %102, %4, %cst_31 {dimension_numbers = #tpu.dot_dimension_numbers<[1], [0], [0], [1], [0, 0, 1, 1], [], []>} : vector<8x8xf32>, vector<8x512xf32>, vector<8x512xf32> -> vector<8x512xf32>
    %cst_32 = arith.constant dense<0.000000e+00> : vector<8x512xf32>
    %104 = tpu.matmul %99, %3, %cst_32 {dimension_numbers = #tpu.dot_dimension_numbers<[1], [0], [0], [1], [0, 0, 1, 1], [], []>} : vector<8x128xf32>, vector<128x512xf32>, vector<8x512xf32> -> vector<8x512xf32>
    %105 = arith.addf %103, %104 : vector<8x512xf32>
    %106 = vector.extract_strided_slice %105 {offsets = [0, 0], sizes = [8, 128], strides = [1, 1]} : vector<8x512xf32> to vector<8x128xf32>
    %107 = arith.negf %106 : vector<8x128xf32>
    %108 = math.exp %107 : vector<8x128xf32>
    %cst_33 = arith.constant 1.000000e+00 : f32
    %109 = vector.broadcast %cst_33 : f32 to vector<8x128xf32>
    %110 = arith.addf %109, %108 : vector<8x128xf32>
    %111 = arith.divf %109, %110 : vector<8x128xf32>
    %112 = vector.extract_strided_slice %105 {offsets = [0, 128], sizes = [8, 128], strides = [1, 1]} : vector<8x512xf32> to vector<8x128xf32>
    %113 = arith.negf %112 : vector<8x128xf32>
    %114 = math.exp %113 : vector<8x128xf32>
    %cst_34 = arith.constant 1.000000e+00 : f32
    %115 = vector.broadcast %cst_34 : f32 to vector<8x128xf32>
    %116 = arith.addf %115, %114 : vector<8x128xf32>
    %117 = arith.divf %115, %116 : vector<8x128xf32>
    %118 = vector.extract_strided_slice %105 {offsets = [0, 256], sizes = [8, 128], strides = [1, 1]} : vector<8x512xf32> to vector<8x128xf32>
    %119 = math.tanh %118 : vector<8x128xf32>
    %120 = vector.extract_strided_slice %105 {offsets = [0, 384], sizes = [8, 128], strides = [1, 1]} : vector<8x512xf32> to vector<8x128xf32>
    %121 = arith.negf %120 : vector<8x128xf32>
    %122 = math.exp %121 : vector<8x128xf32>
    %cst_35 = arith.constant 1.000000e+00 : f32
    %123 = vector.broadcast %cst_35 : f32 to vector<8x128xf32>
    %124 = arith.addf %123, %122 : vector<8x128xf32>
    %125 = arith.divf %123, %124 : vector<8x128xf32>
    %126 = arith.mulf %117, %97 : vector<8x128xf32>
    %127 = arith.mulf %111, %119 : vector<8x128xf32>
    %128 = arith.addf %126, %127 : vector<8x128xf32>
    %129 = math.tanh %128 : vector<8x128xf32>
    %130 = arith.mulf %125, %129 : vector<8x128xf32>
    %c4_i32 = arith.constant 4 : i32
    %131 = arith.index_cast %c4_i32 : i32 to index
    %c0_36 = arith.constant 0 : index
    %c0_37 = arith.constant 0 : index
    %132 = vector.load %arg2[%131, %c0_36, %c0_37] : memref<8x8x8xf32, #tpu.memory_space<vmem>>, vector<1x8x8xf32>
    %133 = vector.shape_cast %132 : vector<1x8x8xf32> to vector<8x8xf32>
    %cst_38 = arith.constant dense<0.000000e+00> : vector<8x512xf32>
    %134 = tpu.matmul %133, %4, %cst_38 {dimension_numbers = #tpu.dot_dimension_numbers<[1], [0], [0], [1], [0, 0, 1, 1], [], []>} : vector<8x8xf32>, vector<8x512xf32>, vector<8x512xf32> -> vector<8x512xf32>
    %cst_39 = arith.constant dense<0.000000e+00> : vector<8x512xf32>
    %135 = tpu.matmul %130, %3, %cst_39 {dimension_numbers = #tpu.dot_dimension_numbers<[1], [0], [0], [1], [0, 0, 1, 1], [], []>} : vector<8x128xf32>, vector<128x512xf32>, vector<8x512xf32> -> vector<8x512xf32>
    %136 = arith.addf %134, %135 : vector<8x512xf32>
    %137 = vector.extract_strided_slice %136 {offsets = [0, 0], sizes = [8, 128], strides = [1, 1]} : vector<8x512xf32> to vector<8x128xf32>
    %138 = arith.negf %137 : vector<8x128xf32>
    %139 = math.exp %138 : vector<8x128xf32>
    %cst_40 = arith.constant 1.000000e+00 : f32
    %140 = vector.broadcast %cst_40 : f32 to vector<8x128xf32>
    %141 = arith.addf %140, %139 : vector<8x128xf32>
    %142 = arith.divf %140, %141 : vector<8x128xf32>
    %143 = vector.extract_strided_slice %136 {offsets = [0, 128], sizes = [8, 128], strides = [1, 1]} : vector<8x512xf32> to vector<8x128xf32>
    %144 = arith.negf %143 : vector<8x128xf32>
    %145 = math.exp %144 : vector<8x128xf32>
    %cst_41 = arith.constant 1.000000e+00 : f32
    %146 = vector.broadcast %cst_41 : f32 to vector<8x128xf32>
    %147 = arith.addf %146, %145 : vector<8x128xf32>
    %148 = arith.divf %146, %147 : vector<8x128xf32>
    %149 = vector.extract_strided_slice %136 {offsets = [0, 256], sizes = [8, 128], strides = [1, 1]} : vector<8x512xf32> to vector<8x128xf32>
    %150 = math.tanh %149 : vector<8x128xf32>
    %151 = vector.extract_strided_slice %136 {offsets = [0, 384], sizes = [8, 128], strides = [1, 1]} : vector<8x512xf32> to vector<8x128xf32>
    %152 = arith.negf %151 : vector<8x128xf32>
    %153 = math.exp %152 : vector<8x128xf32>
    %cst_42 = arith.constant 1.000000e+00 : f32
    %154 = vector.broadcast %cst_42 : f32 to vector<8x128xf32>
    %155 = arith.addf %154, %153 : vector<8x128xf32>
    %156 = arith.divf %154, %155 : vector<8x128xf32>
    %157 = arith.mulf %148, %128 : vector<8x128xf32>
    %158 = arith.mulf %142, %150 : vector<8x128xf32>
    %159 = arith.addf %157, %158 : vector<8x128xf32>
    %160 = math.tanh %159 : vector<8x128xf32>
    %161 = arith.mulf %156, %160 : vector<8x128xf32>
    %c5_i32 = arith.constant 5 : i32
    %162 = arith.index_cast %c5_i32 : i32 to index
    %c0_43 = arith.constant 0 : index
    %c0_44 = arith.constant 0 : index
    %163 = vector.load %arg2[%162, %c0_43, %c0_44] : memref<8x8x8xf32, #tpu.memory_space<vmem>>, vector<1x8x8xf32>
    %164 = vector.shape_cast %163 : vector<1x8x8xf32> to vector<8x8xf32>
    %cst_45 = arith.constant dense<0.000000e+00> : vector<8x512xf32>
    %165 = tpu.matmul %164, %4, %cst_45 {dimension_numbers = #tpu.dot_dimension_numbers<[1], [0], [0], [1], [0, 0, 1, 1], [], []>} : vector<8x8xf32>, vector<8x512xf32>, vector<8x512xf32> -> vector<8x512xf32>
    %cst_46 = arith.constant dense<0.000000e+00> : vector<8x512xf32>
    %166 = tpu.matmul %161, %3, %cst_46 {dimension_numbers = #tpu.dot_dimension_numbers<[1], [0], [0], [1], [0, 0, 1, 1], [], []>} : vector<8x128xf32>, vector<128x512xf32>, vector<8x512xf32> -> vector<8x512xf32>
    %167 = arith.addf %165, %166 : vector<8x512xf32>
    %168 = vector.extract_strided_slice %167 {offsets = [0, 0], sizes = [8, 128], strides = [1, 1]} : vector<8x512xf32> to vector<8x128xf32>
    %169 = arith.negf %168 : vector<8x128xf32>
    %170 = math.exp %169 : vector<8x128xf32>
    %cst_47 = arith.constant 1.000000e+00 : f32
    %171 = vector.broadcast %cst_47 : f32 to vector<8x128xf32>
    %172 = arith.addf %171, %170 : vector<8x128xf32>
    %173 = arith.divf %171, %172 : vector<8x128xf32>
    %174 = vector.extract_strided_slice %167 {offsets = [0, 128], sizes = [8, 128], strides = [1, 1]} : vector<8x512xf32> to vector<8x128xf32>
    %175 = arith.negf %174 : vector<8x128xf32>
    %176 = math.exp %175 : vector<8x128xf32>
    %cst_48 = arith.constant 1.000000e+00 : f32
    %177 = vector.broadcast %cst_48 : f32 to vector<8x128xf32>
    %178 = arith.addf %177, %176 : vector<8x128xf32>
    %179 = arith.divf %177, %178 : vector<8x128xf32>
    %180 = vector.extract_strided_slice %167 {offsets = [0, 256], sizes = [8, 128], strides = [1, 1]} : vector<8x512xf32> to vector<8x128xf32>
    %181 = math.tanh %180 : vector<8x128xf32>
    %182 = vector.extract_strided_slice %167 {offsets = [0, 384], sizes = [8, 128], strides = [1, 1]} : vector<8x512xf32> to vector<8x128xf32>
    %183 = arith.negf %182 : vector<8x128xf32>
    %184 = math.exp %183 : vector<8x128xf32>
    %cst_49 = arith.constant 1.000000e+00 : f32
    %185 = vector.broadcast %cst_49 : f32 to vector<8x128xf32>
    %186 = arith.addf %185, %184 : vector<8x128xf32>
    %187 = arith.divf %185, %186 : vector<8x128xf32>
    %188 = arith.mulf %179, %159 : vector<8x128xf32>
    %189 = arith.mulf %173, %181 : vector<8x128xf32>
    %190 = arith.addf %188, %189 : vector<8x128xf32>
    %191 = math.tanh %190 : vector<8x128xf32>
    %192 = arith.mulf %187, %191 : vector<8x128xf32>
    %c6_i32 = arith.constant 6 : i32
    %193 = arith.index_cast %c6_i32 : i32 to index
    %c0_50 = arith.constant 0 : index
    %c0_51 = arith.constant 0 : index
    %194 = vector.load %arg2[%193, %c0_50, %c0_51] : memref<8x8x8xf32, #tpu.memory_space<vmem>>, vector<1x8x8xf32>
    %195 = vector.shape_cast %194 : vector<1x8x8xf32> to vector<8x8xf32>
    %cst_52 = arith.constant dense<0.000000e+00> : vector<8x512xf32>
    %196 = tpu.matmul %195, %4, %cst_52 {dimension_numbers = #tpu.dot_dimension_numbers<[1], [0], [0], [1], [0, 0, 1, 1], [], []>} : vector<8x8xf32>, vector<8x512xf32>, vector<8x512xf32> -> vector<8x512xf32>
    %cst_53 = arith.constant dense<0.000000e+00> : vector<8x512xf32>
    %197 = tpu.matmul %192, %3, %cst_53 {dimension_numbers = #tpu.dot_dimension_numbers<[1], [0], [0], [1], [0, 0, 1, 1], [], []>} : vector<8x128xf32>, vector<128x512xf32>, vector<8x512xf32> -> vector<8x512xf32>
    %198 = arith.addf %196, %197 : vector<8x512xf32>
    %199 = vector.extract_strided_slice %198 {offsets = [0, 0], sizes = [8, 128], strides = [1, 1]} : vector<8x512xf32> to vector<8x128xf32>
    %200 = arith.negf %199 : vector<8x128xf32>
    %201 = math.exp %200 : vector<8x128xf32>
    %cst_54 = arith.constant 1.000000e+00 : f32
    %202 = vector.broadcast %cst_54 : f32 to vector<8x128xf32>
    %203 = arith.addf %202, %201 : vector<8x128xf32>
    %204 = arith.divf %202, %203 : vector<8x128xf32>
    %205 = vector.extract_strided_slice %198 {offsets = [0, 128], sizes = [8, 128], strides = [1, 1]} : vector<8x512xf32> to vector<8x128xf32>
    %206 = arith.negf %205 : vector<8x128xf32>
    %207 = math.exp %206 : vector<8x128xf32>
    %cst_55 = arith.constant 1.000000e+00 : f32
    %208 = vector.broadcast %cst_55 : f32 to vector<8x128xf32>
    %209 = arith.addf %208, %207 : vector<8x128xf32>
    %210 = arith.divf %208, %209 : vector<8x128xf32>
    %211 = vector.extract_strided_slice %198 {offsets = [0, 256], sizes = [8, 128], strides = [1, 1]} : vector<8x512xf32> to vector<8x128xf32>
    %212 = math.tanh %211 : vector<8x128xf32>
    %213 = vector.extract_strided_slice %198 {offsets = [0, 384], sizes = [8, 128], strides = [1, 1]} : vector<8x512xf32> to vector<8x128xf32>
    %214 = arith.negf %213 : vector<8x128xf32>
    %215 = math.exp %214 : vector<8x128xf32>
    %cst_56 = arith.constant 1.000000e+00 : f32
    %216 = vector.broadcast %cst_56 : f32 to vector<8x128xf32>
    %217 = arith.addf %216, %215 : vector<8x128xf32>
    %218 = arith.divf %216, %217 : vector<8x128xf32>
    %219 = arith.mulf %210, %190 : vector<8x128xf32>
    %220 = arith.mulf %204, %212 : vector<8x128xf32>
    %221 = arith.addf %219, %220 : vector<8x128xf32>
    %222 = math.tanh %221 : vector<8x128xf32>
    %223 = arith.mulf %218, %222 : vector<8x128xf32>
    %c7_i32 = arith.constant 7 : i32
    %224 = arith.index_cast %c7_i32 : i32 to index
    %c0_57 = arith.constant 0 : index
    %c0_58 = arith.constant 0 : index
    %225 = vector.load %arg2[%224, %c0_57, %c0_58] : memref<8x8x8xf32, #tpu.memory_space<vmem>>, vector<1x8x8xf32>
    %226 = vector.shape_cast %225 : vector<1x8x8xf32> to vector<8x8xf32>
    %cst_59 = arith.constant dense<0.000000e+00> : vector<8x512xf32>
    %227 = tpu.matmul %226, %4, %cst_59 {dimension_numbers = #tpu.dot_dimension_numbers<[1], [0], [0], [1], [0, 0, 1, 1], [], []>} : vector<8x8xf32>, vector<8x512xf32>, vector<8x512xf32> -> vector<8x512xf32>
    %cst_60 = arith.constant dense<0.000000e+00> : vector<8x512xf32>
    %228 = tpu.matmul %223, %3, %cst_60 {dimension_numbers = #tpu.dot_dimension_numbers<[1], [0], [0], [1], [0, 0, 1, 1], [], []>} : vector<8x128xf32>, vector<128x512xf32>, vector<8x512xf32> -> vector<8x512xf32>
    %229 = arith.addf %227, %228 : vector<8x512xf32>
    %230 = vector.extract_strided_slice %229 {offsets = [0, 0], sizes = [8, 128], strides = [1, 1]} : vector<8x512xf32> to vector<8x128xf32>
    %231 = arith.negf %230 : vector<8x128xf32>
    %232 = math.exp %231 : vector<8x128xf32>
    %cst_61 = arith.constant 1.000000e+00 : f32
    %233 = vector.broadcast %cst_61 : f32 to vector<8x128xf32>
    %234 = arith.addf %233, %232 : vector<8x128xf32>
    %235 = arith.divf %233, %234 : vector<8x128xf32>
    %236 = vector.extract_strided_slice %229 {offsets = [0, 128], sizes = [8, 128], strides = [1, 1]} : vector<8x512xf32> to vector<8x128xf32>
    %237 = arith.negf %236 : vector<8x128xf32>
    %238 = math.exp %237 : vector<8x128xf32>
    %cst_62 = arith.constant 1.000000e+00 : f32
    %239 = vector.broadcast %cst_62 : f32 to vector<8x128xf32>
    %240 = arith.addf %239, %238 : vector<8x128xf32>
    %241 = arith.divf %239, %240 : vector<8x128xf32>
    %242 = vector.extract_strided_slice %229 {offsets = [0, 256], sizes = [8, 128], strides = [1, 1]} : vector<8x512xf32> to vector<8x128xf32>
    %243 = math.tanh %242 : vector<8x128xf32>
    %244 = vector.extract_strided_slice %229 {offsets = [0, 384], sizes = [8, 128], strides = [1, 1]} : vector<8x512xf32> to vector<8x128xf32>
    %245 = arith.negf %244 : vector<8x128xf32>
    %246 = math.exp %245 : vector<8x128xf32>
    %cst_63 = arith.constant 1.000000e+00 : f32
    %247 = vector.broadcast %cst_63 : f32 to vector<8x128xf32>
    %248 = arith.addf %247, %246 : vector<8x128xf32>
    %249 = arith.divf %247, %248 : vector<8x128xf32>
    %250 = arith.mulf %241, %221 : vector<8x128xf32>
    %251 = arith.mulf %235, %243 : vector<8x128xf32>
    %252 = arith.addf %250, %251 : vector<8x128xf32>
    %253 = math.tanh %252 : vector<8x128xf32>
    %254 = arith.mulf %249, %253 : vector<8x128xf32>
    %c8_i32 = arith.constant 8 : i32
    %c0_64 = arith.constant 0 : index
    %c0_65 = arith.constant 0 : index
    %255 = vector.load %arg6[%c0_64, %c0_65] : memref<8x128xf32, #tpu.memory_space<vmem>>, vector<8x128xf32>
    tpu.vector_store %arg6[%c0_64, %c0_65], %254 {strides = array<i32>} : memref<8x128xf32, #tpu.memory_space<vmem>>, vector<8x128xf32>,
    %c0_66 = arith.constant 0 : index
    %c0_67 = arith.constant 0 : index
    %256 = vector.load %arg7[%c0_66, %c0_67] : memref<8x128xf32, #tpu.memory_space<vmem>>, vector<8x128xf32>
    tpu.vector_store %arg7[%c0_66, %c0_67], %252 {strides = array<i32>} : memref<8x128xf32, #tpu.memory_space<vmem>>, vector<8x128xf32>,
    %c0_i32_68 = arith.constant 0 : i32
    %257 = arith.cmpi eq, %arg1, %c0_i32_68 : i32
    %258 = arith.extui %257 : i1 to i32
    %c0_i32_69 = arith.constant 0 : i32
    %259 = arith.cmpi ne, %258, %c0_i32_69 : i32
    scf.if %259 {
      %c0_70 = arith.constant 0 : index
      %c0_71 = arith.constant 0 : index
      %260 = vector.load %arg5[%c0_70, %c0_71] : memref<8x128xf32, #tpu.memory_space<vmem>>, vector<8x128xf32>
      tpu.vector_store %arg5[%c0_70, %c0_71], %254 {strides = array<i32>} : memref<8x128xf32, #tpu.memory_space<vmem>>, vector<8x128xf32>,
    } else {
    }
    return
  }
  func.func @transform_0(%arg0: i32, %arg1: i32) -> (i32, i32, i32) {
    %c0_i32 = arith.constant 0 : i32
    %c0_i32_0 = arith.constant 0 : i32
    return %arg1, %arg0, %c0_i32 : i32, i32, i32
  }
  func.func @transform_1(%arg0: i32, %arg1: i32) -> (i32, i32) {
    %c0_i32 = arith.constant 0 : i32
    %c0_i32_0 = arith.constant 0 : i32
    %c0_i32_1 = arith.constant 0 : i32
    return %c0_i32, %c0_i32_0 : i32, i32
  }
  func.func @transform_2(%arg0: i32, %arg1: i32) -> (i32, i32) {
    %c0_i32 = arith.constant 0 : i32
    %c0_i32_0 = arith.constant 0 : i32
    %c0_i32_1 = arith.constant 0 : i32
    return %c0_i32, %c0_i32_0 : i32, i32
  }
  func.func @transform_3(%arg0: i32, %arg1: i32) -> (i32, i32) {
    %c0_i32 = arith.constant 0 : i32
    %c0_i32_0 = arith.constant 0 : i32
    return %arg0, %c0_i32 : i32, i32
  }
}

</mosaic_0001>

<llo_original>
// kernel: lstm_model_forward.1
$region0: #{lstm_model_forward.1}
  #allocation0 [shape = 'u32[]', space=smem, size = 0x4, offset = 0x4, fixed_abs, tag = 'smem constant byte address 0x4 - core index']
  #allocation1 [shape = 'u32[144,128]{1,0:T(1,128)}', space=vmem, size = 0x12000, scoped, tag = 'internal scratch']
  #allocation2 [shape = 'f32[8,128]{1,0:T(8,128)}', space=vmem, size = 0x1000, scoped, tag = 'scratch operand']
  #allocation3 [shape = 'f32[8,128]{1,0:T(8,128)}', space=vmem, size = 0x1000, scoped, tag = 'scratch operand']
  %s0 = inlined_call_operand.vmem [shape: f32[8,8,8], index: 0, kind: input, shape index: {}]
  %s1 = inlined_call_operand.hbm [shape: f32[128,512], index: 1, kind: input, shape index: {}]
  %s2 = inlined_call_operand.vmem [shape: f32[8,512], index: 2, kind: input, shape index: {}]
  %s3 = inlined_call_operand.vmem [shape: f32[8,128], index: 3, kind: output, shape index: {}]
  %s4 = sld [smem:[#allocation0]]
  $region34: #{lstm_model_forward.1} parent=0
    _
  %s6 = ssub.s32 1, %s4
  %s7 = scalar_select 0, %s6, %s4
  $region1: #{lstm_model_forward.1} parent=0
    #allocation4 [shape = 'u8[262144]{0}', space=vmem, size = 0x40000, scoped, tag = 'input window, operand 1, single buffered']
    #allocation5 [shape = 's32[1]{0}', space=sflag, size = 0x4, scoped, tag = 'scoped memory for lstm_model_forward.1']
    %8 = vsyncpa [#allocation5], 0
    // Predicated region
    $region2: #{lstm_model_forward.1} parent=1 // pred_check
      _
    $region3: #{lstm_model_forward.1} parent=1 // pred_check_branch
      %10 = sbr.rel (0) target = $region5
    $region4: #{lstm_model_forward.1} parent=1 // pred_region
      _
    $region5: #{lstm_model_forward.1} parent=1 // pred_fallthru
      _
    // Predicated region
    $region6: #{lstm_model_forward.1} parent=1 // pred_check
      _
    $region7: #{lstm_model_forward.1} parent=1 // pred_check_branch
      %12 = sbr.rel (0) target = $region9
    $region8: #{lstm_model_forward.1} parent=1 // pred_region
      %s14 = ssub.s32 8192, 8192
      %15 = vsyncadd [#allocation5], %s14
      %s16 = sshll.u32 [#allocation4], 4
      %s17 = int_to_ptr.vmem [resolvable:$true] %s16
      %22 = dma.hbm_to_vmem [thread:$0]  %s1, 8192, %s17, [#allocation5], 512, 512, 32
    $region9: #{lstm_model_forward.1} parent=1 // pred_fallthru
      _
    // Predicated region
    $region10: #{lstm_model_forward.1} parent=1 // pred_check
      _
    $region11: #{lstm_model_forward.1} parent=1 // pred_check_branch
      %24 = sbr.rel (0) target = $region13
    $region12: #{lstm_model_forward.1} parent=1 // pred_region
      _
    $region13: #{lstm_model_forward.1} parent=1 // pred_fallthru
      _
    // Predicated region
    $region14: #{lstm_model_forward.1} parent=1 // pred_check
      _
    $region15: #{lstm_model_forward.1} parent=1 // pred_check_branch
      %26 = sbr.rel (0) target = $region17
    $region16: #{lstm_model_forward.1} parent=1 // pred_region
      %27 = dma.done [#allocation5], 8192
    $region17: #{lstm_model_forward.1} parent=1 // pred_fallthru
      _
    %p28 = scmp.eq.s32.totalorder 0, 0
    // Predicated region
    $region18: #{lstm_model_forward.1} parent=1 // pred_check
      %p29 = pneg %p28
    $region19: #{lstm_model_forward.1} parent=1 // pred_check_branch
      %31 = sbr.rel (%p29) target = $region21
    $region20: #{lstm_model_forward.1} parent=1 // pred_region
      %32 = vst [vmem:[#allocation2] sm:$0xff] 0.0
      %33 = vst [vmem:[#allocation3] sm:$0xff] 0.0
    $region21: #{lstm_model_forward.1} parent=1 // pred_fallthru
      _
    %v34 = vld [vmem:[#allocation4] sm:$0xff]
    %v35 = vld [vmem:[#allocation4 + $0x8] sm:$0xff]
    %v36 = vld [vmem:[#allocation4 + $0x10] sm:$0xff]
    %v37 = vld [vmem:[#allocation4 + $0x18] sm:$0xff]
    %v38 = vld [vmem:[#allocation4 + $0x20] sm:$0xff]
    %v39 = vld [vmem:[#allocation4 + $0x28] sm:$0xff]
    %v40 = vld [vmem:[#allocation4 + $0x30] sm:$0xff]
    %v41 = vld [vmem:[#allocation4 + $0x38] sm:$0xff]
    %v42 = vld [vmem:[#allocation4 + $0x40] sm:$0xff]
    %v43 = vld [vmem:[#allocation4 + $0x48] sm:$0xff]
    %v44 = vld [vmem:[#allocation4 + $0x50] sm:$0xff]
    %v45 = vld [vmem:[#allocation4 + $0x58] sm:$0xff]
    %v46 = vld [vmem:[#allocation4 + $0x60] sm:$0xff]
    %v47 = vld [vmem:[#allocation4 + $0x68] sm:$0xff]
    %v48 = vld [vmem:[#allocation4 + $0x70] sm:$0xff]
    %v49 = vld [vmem:[#allocation4 + $0x78] sm:$0xff]
    %v50 = vld [vmem:[#allocation4 + $0x80] sm:$0xff]
    %v51 = vld [vmem:[#allocation4 + $0x88] sm:$0xff]
    %v52 = vld [vmem:[#allocation4 + $0x90] sm:$0xff]
    %v53 = vld [vmem:[#allocation4 + $0x98] sm:$0xff]
    %v54 = vld [vmem:[#allocation4 + $0xa0] sm:$0xff]
    %v55 = vld [vmem:[#allocation4 + $0xa8] sm:$0xff]
    %v56 = vld [vmem:[#allocation4 + $0xb0] sm:$0xff]
    %v57 = vld [vmem:[#allocation4 + $0xb8] sm:$0xff]
    %v58 = vld [vmem:[#allocation4 + $0xc0] sm:$0xff]
    %v59 = vld [vmem:[#allocation4 + $0xc8] sm:$0xff]
    %v60 = vld [vmem:[#allocation4 + $0xd0] sm:$0xff]
    %v61 = vld [vmem:[#allocation4 + $0xd8] sm:$0xff]
    %v62 = vld [vmem:[#allocation4 + $0xe0] sm:$0xff]
    %v63 = vld [vmem:[#allocation4 + $0xe8] sm:$0xff]
    %v64 = vld [vmem:[#allocation4 + $0xf0] sm:$0xff]
    %v65 = vld [vmem:[#allocation4 + $0xf8] sm:$0xff]
    %v66 = vld [vmem:[#allocation4 + $0x100] sm:$0xff]
    %v67 = vld [vmem:[#allocation4 + $0x108] sm:$0xff]
    %v68 = vld [vmem:[#allocation4 + $0x110] sm:$0xff]
    %v69 = vld [vmem:[#allocation4 + $0x118] sm:$0xff]
    %v70 = vld [vmem:[#allocation4 + $0x120] sm:$0xff]
    %v71 = vld [vmem:[#allocation4 + $0x128] sm:$0xff]
    %v72 = vld [vmem:[#allocation4 + $0x130] sm:$0xff]
    %v73 = vld [vmem:[#allocation4 + $0x138] sm:$0xff]
    %v74 = vld [vmem:[#allocation4 + $0x140] sm:$0xff]
    %v75 = vld [vmem:[#allocation4 + $0x148] sm:$0xff]
    %v76 = vld [vmem:[#allocation4 + $0x150] sm:$0xff]
    %v77 = vld [vmem:[#allocation4 + $0x158] sm:$0xff]
    %v78 = vld [vmem:[#allocation4 + $0x160] sm:$0xff]
    %v79 = vld [vmem:[#allocation4 + $0x168] sm:$0xff]
    %v80 = vld [vmem:[#allocation4 + $0x170] sm:$0xff]
    %v81 = vld [vmem:[#allocation4 + $0x178] sm:$0xff]
    %v82 = vld [vmem:[#allocation4 + $0x180] sm:$0xff]
    %v83 = vld [vmem:[#allocation4 + $0x188] sm:$0xff]
    %v84 = vld [vmem:[#allocation4 + $0x190] sm:$0xff]
    %v85 = vld [vmem:[#allocation4 + $0x198] sm:$0xff]
    %v86 = vld [vmem:[#allocation4 + $0x1a0] sm:$0xff]
    %v87 = vld [vmem:[#allocation4 + $0x1a8] sm:$0xff]
    %v88 = vld [vmem:[#allocation4 + $0x1b0] sm:$0xff]
    %v89 = vld [vmem:[#allocation4 + $0x1b8] sm:$0xff]
    %v90 = vld [vmem:[#allocation4 + $0x1c0] sm:$0xff]
    %v91 = vld [vmem:[#allocation4 + $0x1c8] sm:$0xff]
    %v92 = vld [vmem:[#allocation4 + $0x1d0] sm:$0xff]
    %v93 = vld [vmem:[#allocation4 + $0x1d8] sm:$0xff]
    %v94 = vld [vmem:[#allocation4 + $0x1e0] sm:$0xff]
    %v95 = vld [vmem:[#allocation4 + $0x1e8] sm:$0xff]
    %v96 = vld [vmem:[#allocation4 + $0x1f0] sm:$0xff]
    %v97 = vld [vmem:[#allocation4 + $0x1f8] sm:$0xff]
    %v98 = vld [vmem:[%s2] sm:$0xff]
    %v99 = vld [vmem:[%s2 + $0x8] sm:$0xff]
    %v100 = vld [vmem:[%s2 + $0x10] sm:$0xff]
    %v101 = vld [vmem:[%s2 + $0x18] sm:$0xff]
    %v102 = vld [vmem:[#allocation2] sm:$0xff]
    %v103 = vld [vmem:[#allocation3] sm:$0xff]
    %v104 = vld [vmem:[%s0] sm:$0xff]
    %105 = vmatprep.subr.mxu0 %v35
    %106 = vmatpush1.msra.mxu0 %v34
    %107 = vmatprep.subr.mxu0 %v39
    %108 = vmatpush1.msra.mxu0 %v38
    %109 = vmatprep.subr.mxu0 %v43
    %110 = vmatpush1.msra.mxu0 %v42
    %111 = vmatprep.subr.mxu0 %v47
    %112 = vmatpush1.msra.mxu0 %v46
    %113 = vmatprep.subr.mxu0 %v51
    %114 = vmatpush1.msra.mxu0 %v50
    %115 = vmatprep.subr.mxu0 %v55
    %116 = vmatpush1.msra.mxu0 %v54
    %117 = vmatprep.subr.mxu0 %v59
    %118 = vmatpush1.msra.mxu0 %v58
    %119 = vmatprep.subr.mxu0 %v63
    %120 = vmatpush1.msra.mxu0 %v62
    %121 = vmatprep.subr.mxu0 %v67
    %122 = vmatpush1.msra.mxu0 %v66
    %123 = vmatprep.subr.mxu0 %v71
    %124 = vmatpush1.msra.mxu0 %v70
    %125 = vmatprep.subr.mxu0 %v75
    %126 = vmatpush1.msra.mxu0 %v74
    %127 = vmatprep.subr.mxu0 %v79
    %128 = vmatpush1.msra.mxu0 %v78
    %129 = vmatprep.subr.mxu0 %v83
    %130 = vmatpush1.msra.mxu0 %v82
    %131 = vmatprep.subr.mxu0 %v87
    %132 = vmatpush1.msra.mxu0 %v86
    %133 = vmatprep.subr.mxu0 %v91
    %134 = vmatpush1.msra.mxu0 %v90
    %135 = vmatprep.subr.mxu0 %v95
    %136 = vmatpush1.msra.mxu0 %v94
    %137 = vmatprep.subr.mxu0 0.0
    %138 = vmatpush1.msra.mxu0 0.0
    %139 = vmatprep.subr.mxu0 0.0
    %140 = vmatpush1.msra.mxu0 0.0
    %141 = vmatprep.subr.mxu0 0.0
    %142 = vmatpush1.msra.mxu0 0.0
    %143 = vmatprep.subr.mxu0 0.0
    %144 = vmatpush1.msra.mxu0 0.0
    %145 = vmatprep.subr.mxu0 0.0
    %146 = vmatpush1.msra.mxu0 0.0
    %147 = vmatprep.subr.mxu0 0.0
    %148 = vmatpush1.msra.mxu0 0.0
    %149 = vmatprep.subr.mxu0 0.0
    %150 = vmatpush1.msra.mxu0 0.0
    %151 = vmatprep.subr.mxu0 0.0
    %152 = vmatpush1.msra.mxu0 0.0
    %153 = vmatprep.subr.mxu0 0.0
    %154 = vmatpush1.msra.mxu0 0.0
    %155 = vmatprep.subr.mxu0 0.0
    %156 = vmatpush1.msra.mxu0 0.0
    %157 = vmatprep.subr.mxu0 0.0
    %158 = vmatpush1.msra.mxu0 0.0
    %159 = vmatprep.subr.mxu0 0.0
    %160 = vmatpush1.msra.mxu0 0.0
    %161 = vmatprep.subr.mxu0 0.0
    %162 = vmatpush1.msra.mxu0 0.0
    %163 = vmatprep.subr.mxu0 0.0
    %164 = vmatpush1.msra.mxu0 0.0
    %165 = vmatprep.subr.mxu0 0.0
    %166 = vmatpush1.msra.mxu0 0.0
    %167 = vmatprep.subr.mxu0 0.0
    %168 = vmatpush1.msra.mxu0 0.0
    %169 = vmatprep.mubr.f32.mxu0 0.0
    %170 = vmatmul.mubr.f32.gmra.mrb[0].mxu0 %v102
    %v171 = vpop.f32.mrb[0].mxu0
    %v172 = vadd.f32 0.0, %v171
    %v173 = vpop.f32.mrb[0].mxu0
    %v174 = vadd.f32 0.0, %v173
    %175 = vdwg.mxu0
    %176 = vmatprep.subr.mxu0 %v37
    %177 = vmatpush1.msra.mxu0 %v36
    %178 = vmatprep.subr.mxu0 %v41
    %179 = vmatpush1.msra.mxu0 %v40
    %180 = vmatprep.subr.mxu0 %v45
    %181 = vmatpush1.msra.mxu0 %v44
    %182 = vmatprep.subr.mxu0 %v49
    %183 = vmatpush1.msra.mxu0 %v48
    %184 = vmatprep.subr.mxu0 %v53
    %185 = vmatpush1.msra.mxu0 %v52
    %186 = vmatprep.subr.mxu0 %v57
    %187 = vmatpush1.msra.mxu0 %v56
    %188 = vmatprep.subr.mxu0 %v61
    %189 = vmatpush1.msra.mxu0 %v60
    %190 = vmatprep.subr.mxu0 %v65
    %191 = vmatpush1.msra.mxu0 %v64
    %192 = vmatprep.subr.mxu0 %v69
    %193 = vmatpush1.msra.mxu0 %v68
    %194 = vmatprep.subr.mxu0 %v73
    %195 = vmatpush1.msra.mxu0 %v72
    %196 = vmatprep.subr.mxu0 %v77
    %197 = vmatpush1.msra.mxu0 %v76
    %198 = vmatprep.subr.mxu0 %v81
    %199 = vmatpush1.msra.mxu0 %v80
    %200 = vmatprep.subr.mxu0 %v85
    %201 = vmatpush1.msra.mxu0 %v84
    %202 = vmatprep.subr.mxu0 %v89
    %203 = vmatpush1.msra.mxu0 %v88
    %204 = vmatprep.subr.mxu0 %v93
    %205 = vmatpush1.msra.mxu0 %v92
    %206 = vmatprep.subr.mxu0 %v97
    %207 = vmatpush1.msra.mxu0 %v96
    %208 = vmatprep.subr.mxu0 0.0
    %209 = vmatpush1.msra.mxu0 0.0
    %210 = vmatprep.subr.mxu0 0.0
    %211 = vmatpush1.msra.mxu0 0.0
    %212 = vmatprep.subr.mxu0 0.0
    %213 = vmatpush1.msra.mxu0 0.0
    %214 = vmatprep.subr.mxu0 0.0
    %215 = vmatpush1.msra.mxu0 0.0
    %216 = vmatprep.subr.mxu0 0.0
    %217 = vmatpush1.msra.mxu0 0.0
    %218 = vmatprep.subr.mxu0 0.0
    %219 = vmatpush1.msra.mxu0 0.0
    %220 = vmatprep.subr.mxu0 0.0
    %221 = vmatpush1.msra.mxu0 0.0
    %222 = vmatprep.subr.mxu0 0.0
    %223 = vmatpush1.msra.mxu0 0.0
    %224 = vmatprep.subr.mxu0 0.0
    %225 = vmatpush1.msra.mxu0 0.0
    %226 = vmatprep.subr.mxu0 0.0
    %227 = vmatpush1.msra.mxu0 0.0
    %228 = vmatprep.subr.mxu0 0.0
    %229 = vmatpush1.msra.mxu0 0.0
    %230 = vmatprep.subr.mxu0 0.0
    %231 = vmatpush1.msra.mxu0 0.0
    %232 = vmatprep.subr.mxu0 0.0
    %233 = vmatpush1.msra.mxu0 0.0
    %234 = vmatprep.subr.mxu0 0.0
    %235 = vmatpush1.msra.mxu0 0.0
    %236 = vmatprep.subr.mxu0 0.0
    %237 = vmatpush1.msra.mxu0 0.0
    %238 = vmatprep.subr.mxu0 0.0
    %239 = vmatpush1.msra.mxu0 0.0
    %240 = vmatprep.mubr.f32.mxu0 0.0
    %241 = vmatmul.mubr.f32.gmra.mrb[0].mxu0 %v102
    %v242 = vpop.f32.mrb[0].mxu0
    %v243 = vadd.f32 0.0, %v242
    %v244 = vpop.f32.mrb[0].mxu0
    %v245 = vadd.f32 0.0, %v244
    %246 = vdwg.mxu0
    %vm247 = vcmask 64512
    %v249 = vsel %vm247, %v104, 0
    %251 = vmatprep.subr.mxu0 %v99
    %252 = vmatpush1.msra.mxu0 %v98
    %253 = vmatprep.subr.mxu0 0.0
    %254 = vmatpush1.msra.mxu0 0.0
    %255 = vmatprep.subr.mxu0 0.0
    %256 = vmatpush1.msra.mxu0 0.0
    %257 = vmatprep.subr.mxu0 0.0
    %258 = vmatpush1.msra.mxu0 0.0
    %259 = vmatprep.subr.mxu0 0.0
    %260 = vmatpush1.msra.mxu0 0.0
    %261 = vmatprep.subr.mxu0 0.0
    %262 = vmatpush1.msra.mxu0 0.0
    %263 = vmatprep.subr.mxu0 0.0
    %264 = vmatpush1.msra.mxu0 0.0
    %265 = vmatprep.subr.mxu0 0.0
    %266 = vmatpush1.msra.mxu0 0.0
    %267 = vmatprep.subr.mxu0 0.0
    %268 = vmatpush1.msra.mxu0 0.0
    %269 = vmatprep.subr.mxu0 0.0
    %270 = vmatpush1.msra.mxu0 0.0
    %271 = vmatprep.subr.mxu0 0.0
    %272 = vmatpush1.msra.mxu0 0.0
    %273 = vmatprep.subr.mxu0 0.0
    %274 = vmatpush1.msra.mxu0 0.0
    %275 = vmatprep.subr.mxu0 0.0
    %276 = vmatpush1.msra.mxu0 0.0
    %277 = vmatprep.subr.mxu0 0.0
    %278 = vmatpush1.msra.mxu0 0.0
    %279 = vmatprep.subr.mxu0 0.0
    %280 = vmatpush1.msra.mxu0 0.0
    %281 = vmatprep.subr.mxu0 0.0
    %282 = vmatpush1.msra.mxu0 0.0
    %283 = vmatprep.subr.mxu0 0.0
    %284 = vmatpush1.msra.mxu0 0.0
    %285 = vmatprep.subr.mxu0 0.0
    %286 = vmatpush1.msra.mxu0 0.0
    %287 = vmatprep.subr.mxu0 0.0
    %288 = vmatpush1.msra.mxu0 0.0
    %289 = vmatprep.subr.mxu0 0.0
    %290 = vmatpush1.msra.mxu0 0.0
    %291 = vmatprep.subr.mxu0 0.0
    %292 = vmatpush1.msra.mxu0 0.0
    %293 = vmatprep.subr.mxu0 0.0
    %294 = vmatpush1.msra.mxu0 0.0
    %295 = vmatprep.subr.mxu0 0.0
    %296 = vmatpush1.msra.mxu0 0.0
    %297 = vmatprep.subr.mxu0 0.0
    %298 = vmatpush1.msra.mxu0 0.0
    %299 = vmatprep.subr.mxu0 0.0
    %300 = vmatpush1.msra.mxu0 0.0
    %301 = vmatprep.subr.mxu0 0.0
    %302 = vmatpush1.msra.mxu0 0.0
    %303 = vmatprep.subr.mxu0 0.0
    %304 = vmatpush1.msra.mxu0 0.0
    %305 = vmatprep.subr.mxu0 0.0
    %306 = vmatpush1.msra.mxu0 0.0
    %307 = vmatprep.subr.mxu0 0.0
    %308 = vmatpush1.msra.mxu0 0.0
    %309 = vmatprep.subr.mxu0 0.0
    %310 = vmatpush1.msra.mxu0 0.0
    %311 = vmatprep.subr.mxu0 0.0
    %312 = vmatpush1.msra.mxu0 0.0
    %313 = vmatprep.subr.mxu0 0.0
    %314 = vmatpush1.msra.mxu0 0.0
    %315 = vmatprep.mubr.f32.mxu0 0.0
    %316 = vmatmul.mubr.f32.gmra.mrb[0].mxu0 %v249
    %v317 = vpop.f32.mrb[0].mxu0
    %v318 = vadd.f32 %v172, %v317
    %v319 = vpop.f32.mrb[0].mxu0
    %v320 = vadd.f32 %v174, %v319
    %321 = vdwg.mxu0
    %322 = vmatprep.subr.mxu0 %v101
    %323 = vmatpush1.msra.mxu0 %v100
    %324 = vmatprep.subr.mxu0 0.0
    %325 = vmatpush1.msra.mxu0 0.0
    %326 = vmatprep.subr.mxu0 0.0
    %327 = vmatpush1.msra.mxu0 0.0
    %328 = vmatprep.subr.mxu0 0.0
    %329 = vmatpush1.msra.mxu0 0.0
    %330 = vmatprep.subr.mxu0 0.0
    %331 = vmatpush1.msra.mxu0 0.0
    %332 = vmatprep.subr.mxu0 0.0
    %333 = vmatpush1.msra.mxu0 0.0
    %334 = vmatprep.subr.mxu0 0.0
    %335 = vmatpush1.msra.mxu0 0.0
    %336 = vmatprep.subr.mxu0 0.0
    %337 = vmatpush1.msra.mxu0 0.0
    %338 = vmatprep.subr.mxu0 0.0
    %339 = vmatpush1.msra.mxu0 0.0
    %340 = vmatprep.subr.mxu0 0.0
    %341 = vmatpush1.msra.mxu0 0.0
    %342 = vmatprep.subr.mxu0 0.0
    %343 = vmatpush1.msra.mxu0 0.0
    %344 = vmatprep.subr.mxu0 0.0
    %345 = vmatpush1.msra.mxu0 0.0
    %346 = vmatprep.subr.mxu0 0.0
    %347 = vmatpush1.msra.mxu0 0.0
    %348 = vmatprep.subr.mxu0 0.0
    %349 = vmatpush1.msra.mxu0 0.0
    %350 = vmatprep.subr.mxu0 0.0
    %351 = vmatpush1.msra.mxu0 0.0
    %352 = vmatprep.subr.mxu0 0.0
    %353 = vmatpush1.msra.mxu0 0.0
    %354 = vmatprep.subr.mxu0 0.0
    %355 = vmatpush1.msra.mxu0 0.0
    %356 = vmatprep.subr.mxu0 0.0
    %357 = vmatpush1.msra.mxu0 0.0
    %358 = vmatprep.subr.mxu0 0.0
    %359 = vmatpush1.msra.mxu0 0.0
    %360 = vmatprep.subr.mxu0 0.0
    %361 = vmatpush1.msra.mxu0 0.0
    %362 = vmatprep.subr.mxu0 0.0
    %363 = vmatpush1.msra.mxu0 0.0
    %364 = vmatprep.subr.mxu0 0.0
    %365 = vmatpush1.msra.mxu0 0.0
    %366 = vmatprep.subr.mxu0 0.0
    %367 = vmatpush1.msra.mxu0 0.0
    %368 = vmatprep.subr.mxu0 0.0
    %369 = vmatpush1.msra.mxu0 0.0
    %370 = vmatprep.subr.mxu0 0.0
    %371 = vmatpush1.msra.mxu0 0.0
    %372 = vmatprep.subr.mxu0 0.0
    %373 = vmatpush1.msra.mxu0 0.0
    %374 = vmatprep.subr.mxu0 0.0
    %375 = vmatpush1.msra.mxu0 0.0
    %376 = vmatprep.subr.mxu0 0.0
    %377 = vmatpush1.msra.mxu0 0.0
    %378 = vmatprep.subr.mxu0 0.0
    %379 = vmatpush1.msra.mxu0 0.0
    %380 = vmatprep.subr.mxu0 0.0
    %381 = vmatpush1.msra.mxu0 0.0
    %382 = vmatprep.subr.mxu0 0.0
    %383 = vmatpush1.msra.mxu0 0.0
    %384 = vmatprep.subr.mxu0 0.0
    %385 = vmatpush1.msra.mxu0 0.0
    %386 = vmatprep.mubr.f32.mxu0 0.0
    %387 = vmatmul.mubr.f32.gmra.mrb[0].mxu0 %v249
    %v388 = vpop.f32.mrb[0].mxu0
    %v389 = vadd.f32 %v243, %v388
    %v390 = vpop.f32.mrb[0].mxu0
    %v391 = vadd.f32 %v245, %v390
    %392 = vdwg.mxu0
    %v393 = vxor.u32 %v318, 2147483648
    %v394 = vmul.f32 %v393, 1.442695
    %v395 = vpow.pop %v394
    %v396 = vadd.f32 %v395, 1.0
    %v397 = vrcp.pop %v396
    %v398 = vmul.f32 1.0, %v397
    %v399 = vxor.u32 %v320, 2147483648
    %v400 = vmul.f32 %v399, 1.442695
    %v401 = vpow.pop %v400
    %v402 = vadd.f32 %v401, 1.0
    %v403 = vrcp.pop %v402
    %v404 = vmul.f32 1.0, %v403
    %v405 = vtanh.pop %v389
    %v406 = vxor.u32 %v391, 2147483648
    %v407 = vmul.f32 %v406, 1.442695
    %v408 = vpow.pop %v407
    %v409 = vadd.f32 %v408, 1.0
    %v410 = vrcp.pop %v409
    %v411 = vmul.f32 1.0, %v410
    %v412 = vmul.f32 %v404, %v103
    %v413 = vmul.f32 %v398, %v405
    %v414 = vadd.f32 %v412, %v413
    %v415 = vtanh.pop %v414
    %v416 = vmul.f32 %v411, %v415
    %s417 = scalar_lea.vmem %s0, 8
    %v418 = vld [vmem:[%s417] sm:$0xff]
    %419 = vmatprep.subr.mxu0 %v35
    %420 = vmatpush1.msra.mxu0 %v34
    %421 = vmatprep.subr.mxu0 %v39
    %422 = vmatpush1.msra.mxu0 %v38
    %423 = vmatprep.subr.mxu0 %v43
    %424 = vmatpush1.msra.mxu0 %v42
    %425 = vmatprep.subr.mxu0 %v47
    %426 = vmatpush1.msra.mxu0 %v46
    %427 = vmatprep.subr.mxu0 %v51
    %428 = vmatpush1.msra.mxu0 %v50
    %429 = vmatprep.subr.mxu0 %v55
    %430 = vmatpush1.msra.mxu0 %v54
    %431 = vmatprep.subr.mxu0 %v59
    %432 = vmatpush1.msra.mxu0 %v58
    %433 = vmatprep.subr.mxu0 %v63
    %434 = vmatpush1.msra.mxu0 %v62
    %435 = vmatprep.subr.mxu0 %v67
    %436 = vmatpush1.msra.mxu0 %v66
    %437 = vmatprep.subr.mxu0 %v71
    %438 = vmatpush1.msra.mxu0 %v70
    %439 = vmatprep.subr.mxu0 %v75
    %440 = vmatpush1.msra.mxu0 %v74
    %441 = vmatprep.subr.mxu0 %v79
    %442 = vmatpush1.msra.mxu0 %v78
    %443 = vmatprep.subr.mxu0 %v83
    %444 = vmatpush1.msra.mxu0 %v82
    %445 = vmatprep.subr.mxu0 %v87
    %446 = vmatpush1.msra.mxu0 %v86
    %447 = vmatprep.subr.mxu0 %v91
    %448 = vmatpush1.msra.mxu0 %v90
    %449 = vmatprep.subr.mxu0 %v95
    %450 = vmatpush1.msra.mxu0 %v94
    %451 = vmatprep.subr.mxu0 0.0
    %452 = vmatpush1.msra.mxu0 0.0
    %453 = vmatprep.subr.mxu0 0.0
    %454 = vmatpush1.msra.mxu0 0.0
    %455 = vmatprep.subr.mxu0 0.0
    %456 = vmatpush1.msra.mxu0 0.0
    %457 = vmatprep.subr.mxu0 0.0
    %458 = vmatpush1.msra.mxu0 0.0
    %459 = vmatprep.subr.mxu0 0.0
    %460 = vmatpush1.msra.mxu0 0.0
    %461 = vmatprep.subr.mxu0 0.0
    %462 = vmatpush1.msra.mxu0 0.0
    %463 = vmatprep.subr.mxu0 0.0
    %464 = vmatpush1.msra.mxu0 0.0
    %465 = vmatprep.subr.mxu0 0.0
    %466 = vmatpush1.msra.mxu0 0.0
    %467 = vmatprep.subr.mxu0 0.0
    %468 = vmatpush1.msra.mxu0 0.0
    %469 = vmatprep.subr.mxu0 0.0
    %470 = vmatpush1.msra.mxu0 0.0
    %471 = vmatprep.subr.mxu0 0.0
    %472 = vmatpush1.msra.mxu0 0.0
    %473 = vmatprep.subr.mxu0 0.0
    %474 = vmatpush1.msra.mxu0 0.0
    %475 = vmatprep.subr.mxu0 0.0
    %476 = vmatpush1.msra.mxu0 0.0
    %477 = vmatprep.subr.mxu0 0.0
    %478 = vmatpush1.msra.mxu0 0.0
    %479 = vmatprep.subr.mxu0 0.0
    %480 = vmatpush1.msra.mxu0 0.0
    %481 = vmatprep.subr.mxu0 0.0
    %482 = vmatpush1.msra.mxu0 0.0
    %483 = vmatprep.mubr.f32.mxu0 0.0
    %484 = vmatmul.mubr.f32.gmra.mrb[0].mxu0 %v416
    %v485 = vpop.f32.mrb[0].mxu0
    %v486 = vadd.f32 0.0, %v485
    %v487 = vpop.f32.mrb[0].mxu0
    %v488 = vadd.f32 0.0, %v487
    %489 = vdwg.mxu0
    %490 = vmatprep.subr.mxu0 %v37
    %491 = vmatpush1.msra.mxu0 %v36
    %492 = vmatprep.subr.mxu0 %v41
    %493 = vmatpush1.msra.mxu0 %v40
    %494 = vmatprep.subr.mxu0 %v45
    %495 = vmatpush1.msra.mxu0 %v44
    %496 = vmatprep.subr.mxu0 %v49
    %497 = vmatpush1.msra.mxu0 %v48
    %498 = vmatprep.subr.mxu0 %v53
    %499 = vmatpush1.msra.mxu0 %v52
    %500 = vmatprep.subr.mxu0 %v57
    %501 = vmatpush1.msra.mxu0 %v56
    %502 = vmatprep.subr.mxu0 %v61
    %503 = vmatpush1.msra.mxu0 %v60
    %504 = vmatprep.subr.mxu0 %v65
    %505 = vmatpush1.msra.mxu0 %v64
    %506 = vmatprep.subr.mxu0 %v69
    %507 = vmatpush1.msra.mxu0 %v68
    %508 = vmatprep.subr.mxu0 %v73
    %509 = vmatpush1.msra.mxu0 %v72
    %510 = vmatprep.subr.mxu0 %v77
    %511 = vmatpush1.msra.mxu0 %v76
    %512 = vmatprep.subr.mxu0 %v81
    %513 = vmatpush1.msra.mxu0 %v80
    %514 = vmatprep.subr.mxu0 %v85
    %515 = vmatpush1.msra.mxu0 %v84
    %516 = vmatprep.subr.mxu0 %v89
    %517 = vmatpush1.msra.mxu0 %v88
    %518 = vmatprep.subr.mxu0 %v93
    %519 = vmatpush1.msra.mxu0 %v92
    %520 = vmatprep.subr.mxu0 %v97
    %521 = vmatpush1.msra.mxu0 %v96
    %522 = vmatprep.subr.mxu0 0.0
    %523 = vmatpush1.msra.mxu0 0.0
    %524 = vmatprep.subr.mxu0 0.0
    %525 = vmatpush1.msra.mxu0 0.0
    %526 = vmatprep.subr.mxu0 0.0
    %527 = vmatpush1.msra.mxu0 0.0
    %528 = vmatprep.subr.mxu0 0.0
    %529 = vmatpush1.msra.mxu0 0.0
    %530 = vmatprep.subr.mxu0 0.0
    %531 = vmatpush1.msra.mxu0 0.0
    %532 = vmatprep.subr.mxu0 0.0
    %533 = vmatpush1.msra.mxu0 0.0
    %534 = vmatprep.subr.mxu0 0.0
    %535 = vmatpush1.msra.mxu0 0.0
    %536 = vmatprep.subr.mxu0 0.0
    %537 = vmatpush1.msra.mxu0 0.0
    %538 = vmatprep.subr.mxu0 0.0
    %539 = vmatpush1.msra.mxu0 0.0
    %540 = vmatprep.subr.mxu0 0.0
    %541 = vmatpush1.msra.mxu0 0.0
    %542 = vmatprep.subr.mxu0 0.0
    %543 = vmatpush1.msra.mxu0 0.0
    %544 = vmatprep.subr.mxu0 0.0
    %545 = vmatpush1.msra.mxu0 0.0
    %546 = vmatprep.subr.mxu0 0.0
    %547 = vmatpush1.msra.mxu0 0.0
    %548 = vmatprep.subr.mxu0 0.0
    %549 = vmatpush1.msra.mxu0 0.0
    %550 = vmatprep.subr.mxu0 0.0
    %551 = vmatpush1.msra.mxu0 0.0
    %552 = vmatprep.subr.mxu0 0.0
    %553 = vmatpush1.msra.mxu0 0.0
    %554 = vmatprep.mubr.f32.mxu0 0.0
    %555 = vmatmul.mubr.f32.gmra.mrb[0].mxu0 %v416
    %v556 = vpop.f32.mrb[0].mxu0
    %v557 = vadd.f32 0.0, %v556
    %v558 = vpop.f32.mrb[0].mxu0
    %v559 = vadd.f32 0.0, %v558
    %560 = vdwg.mxu0
    %v562 = vsel %vm247, %v418, 0
    %564 = vmatprep.subr.mxu0 %v99
    %565 = vmatpush1.msra.mxu0 %v98
    %566 = vmatprep.subr.mxu0 0.0
    %567 = vmatpush1.msra.mxu0 0.0
    %568 = vmatprep.subr.mxu0 0.0
    %569 = vmatpush1.msra.mxu0 0.0
    %570 = vmatprep.subr.mxu0 0.0
    %571 = vmatpush1.msra.mxu0 0.0
    %572 = vmatprep.subr.mxu0 0.0
    %573 = vmatpush1.msra.mxu0 0.0
    %574 = vmatprep.subr.mxu0 0.0
    %575 = vmatpush1.msra.mxu0 0.0
    %576 = vmatprep.subr.mxu0 0.0
    %577 = vmatpush1.msra.mxu0 0.0
    %578 = vmatprep.subr.mxu0 0.0
    %579 = vmatpush1.msra.mxu0 0.0
    %580 = vmatprep.subr.mxu0 0.0
    %581 = vmatpush1.msra.mxu0 0.0
    %582 = vmatprep.subr.mxu0 0.0
    %583 = vmatpush1.msra.mxu0 0.0
    %584 = vmatprep.subr.mxu0 0.0
    %585 = vmatpush1.msra.mxu0 0.0
    %586 = vmatprep.subr.mxu0 0.0
    %587 = vmatpush1.msra.mxu0 0.0
    %588 = vmatprep.subr.mxu0 0.0
    %589 = vmatpush1.msra.mxu0 0.0
    %590 = vmatprep.subr.mxu0 0.0
    %591 = vmatpush1.msra.mxu0 0.0
    %592 = vmatprep.subr.mxu0 0.0
    %593 = vmatpush1.msra.mxu0 0.0
    %594 = vmatprep.subr.mxu0 0.0
    %595 = vmatpush1.msra.mxu0 0.0
    %596 = vmatprep.subr.mxu0 0.0
    %597 = vmatpush1.msra.mxu0 0.0
    %598 = vmatprep.subr.mxu0 0.0
    %599 = vmatpush1.msra.mxu0 0.0
    %600 = vmatprep.subr.mxu0 0.0
    %601 = vmatpush1.msra.mxu0 0.0
    %602 = vmatprep.subr.mxu0 0.0
    %603 = vmatpush1.msra.mxu0 0.0
    %604 = vmatprep.subr.mxu0 0.0
    %605 = vmatpush1.msra.mxu0 0.0
    %606 = vmatprep.subr.mxu0 0.0
    %607 = vmatpush1.msra.mxu0 0.0
    %608 = vmatprep.subr.mxu0 0.0
    %609 = vmatpush1.msra.mxu0 0.0
    %610 = vmatprep.subr.mxu0 0.0
    %611 = vmatpush1.msra.mxu0 0.0
    %612 = vmatprep.subr.mxu0 0.0
    %613 = vmatpush1.msra.mxu0 0.0
    %614 = vmatprep.subr.mxu0 0.0
    %615 = vmatpush1.msra.mxu0 0.0
    %616 = vmatprep.subr.mxu0 0.0
    %617 = vmatpush1.msra.mxu0 0.0
    %618 = vmatprep.subr.mxu0 0.0
    %619 = vmatpush1.msra.mxu0 0.0
    %620 = vmatprep.subr.mxu0 0.0
    %621 = vmatpush1.msra.mxu0 0.0
    %622 = vmatprep.subr.mxu0 0.0
    %623 = vmatpush1.msra.mxu0 0.0
    %624 = vmatprep.subr.mxu0 0.0
    %625 = vmatpush1.msra.mxu0 0.0
    %626 = vmatprep.subr.mxu0 0.0
    %627 = vmatpush1.msra.mxu0 0.0
    %628 = vmatprep.mubr.f32.mxu0 0.0
    %629 = vmatmul.mubr.f32.gmra.mrb[0].mxu0 %v562
    %v630 = vpop.f32.mrb[0].mxu0
    %v631 = vadd.f32 %v486, %v630
    %v632 = vpop.f32.mrb[0].mxu0
    %v633 = vadd.f32 %v488, %v632
    %634 = vdwg.mxu0
    %635 = vmatprep.subr.mxu0 %v101
    %636 = vmatpush1.msra.mxu0 %v100
    %637 = vmatprep.subr.mxu0 0.0
    %638 = vmatpush1.msra.mxu0 0.0
    %639 = vmatprep.subr.mxu0 0.0
    %640 = vmatpush1.msra.mxu0 0.0
    %641 = vmatprep.subr.mxu0 0.0
    %642 = vmatpush1.msra.mxu0 0.0
    %643 = vmatprep.subr.mxu0 0.0
    %644 = vmatpush1.msra.mxu0 0.0
    %645 = vmatprep.subr.mxu0 0.0
    %646 = vmatpush1.msra.mxu0 0.0
    %647 = vmatprep.subr.mxu0 0.0
    %648 = vmatpush1.msra.mxu0 0.0
    %649 = vmatprep.subr.mxu0 0.0
    %650 = vmatpush1.msra.mxu0 0.0
    %651 = vmatprep.subr.mxu0 0.0
    %652 = vmatpush1.msra.mxu0 0.0
    %653 = vmatprep.subr.mxu0 0.0
    %654 = vmatpush1.msra.mxu0 0.0
    %655 = vmatprep.subr.mxu0 0.0
    %656 = vmatpush1.msra.mxu0 0.0
    %657 = vmatprep.subr.mxu0 0.0
    %658 = vmatpush1.msra.mxu0 0.0
    %659 = vmatprep.subr.mxu0 0.0
    %660 = vmatpush1.msra.mxu0 0.0
    %661 = vmatprep.subr.mxu0 0.0
    %662 = vmatpush1.msra.mxu0 0.0
    %663 = vmatprep.subr.mxu0 0.0
    %664 = vmatpush1.msra.mxu0 0.0
    %665 = vmatprep.subr.mxu0 0.0
    %666 = vmatpush1.msra.mxu0 0.0
    %667 = vmatprep.subr.mxu0 0.0
    %668 = vmatpush1.msra.mxu0 0.0
    %669 = vmatprep.subr.mxu0 0.0
    %670 = vmatpush1.msra.mxu0 0.0
    %671 = vmatprep.subr.mxu0 0.0
    %672 = vmatpush1.msra.mxu0 0.0
    %673 = vmatprep.subr.mxu0 0.0
    %674 = vmatpush1.msra.mxu0 0.0
    %675 = vmatprep.subr.mxu0 0.0
    %676 = vmatpush1.msra.mxu0 0.0
    %677 = vmatprep.subr.mxu0 0.0
    %678 = vmatpush1.msra.mxu0 0.0
    %679 = vmatprep.subr.mxu0 0.0
    %680 = vmatpush1.msra.mxu0 0.0
    %681 = vmatprep.subr.mxu0 0.0
    %682 = vmatpush1.msra.mxu0 0.0
    %683 = vmatprep.subr.mxu0 0.0
    %684 = vmatpush1.msra.mxu0 0.0
    %685 = vmatprep.subr.mxu0 0.0
    %686 = vmatpush1.msra.mxu0 0.0
    %687 = vmatprep.subr.mxu0 0.0
    %688 = vmatpush1.msra.mxu0 0.0
    %689 = vmatprep.subr.mxu0 0.0
    %690 = vmatpush1.msra.mxu0 0.0
    %691 = vmatprep.subr.mxu0 0.0
    %692 = vmatpush1.msra.mxu0 0.0
    %693 = vmatprep.subr.mxu0 0.0
    %694 = vmatpush1.msra.mxu0 0.0
    %695 = vmatprep.subr.mxu0 0.0
    %696 = vmatpush1.msra.mxu0 0.0
    %697 = vmatprep.subr.mxu0 0.0
    %698 = vmatpush1.msra.mxu0 0.0
    %699 = vmatprep.mubr.f32.mxu0 0.0
    %700 = vmatmul.mubr.f32.gmra.mrb[0].mxu0 %v562
    %v701 = vpop.f32.mrb[0].mxu0
    %v702 = vadd.f32 %v557, %v701
    %v703 = vpop.f32.mrb[0].mxu0
    %v704 = vadd.f32 %v559, %v703
    %705 = vdwg.mxu0
    %v706 = vxor.u32 %v631, 2147483648
    %v707 = vmul.f32 %v706, 1.442695
    %v708 = vpow.pop %v707
    %v709 = vadd.f32 %v708, 1.0
    %v710 = vrcp.pop %v709
    %v711 = vmul.f32 1.0, %v710
    %v712 = vxor.u32 %v633, 2147483648
    %v713 = vmul.f32 %v712, 1.442695
    %v714 = vpow.pop %v713
    %v715 = vadd.f32 %v714, 1.0
    %v716 = vrcp.pop %v715
    %v717 = vmul.f32 1.0, %v716
    %v718 = vtanh.pop %v702
    %v719 = vxor.u32 %v704, 2147483648
    %v720 = vmul.f32 %v719, 1.442695
    %v721 = vpow.pop %v720
    %v722 = vadd.f32 %v721, 1.0
    %v723 = vrcp.pop %v722
    %v724 = vmul.f32 1.0, %v723
    %v725 = vmul.f32 %v717, %v414
    %v726 = vmul.f32 %v711, %v718
    %v727 = vadd.f32 %v725, %v726
    %v728 = vtanh.pop %v727
    %v729 = vmul.f32 %v724, %v728
    %s730 = scalar_lea.vmem %s0, 16
    %v731 = vld [vmem:[%s730] sm:$0xff]
    %732 = vmatprep.subr.mxu0 %v35
    %733 = vmatpush1.msra.mxu0 %v34
    %734 = vmatprep.subr.mxu0 %v39
    %735 = vmatpush1.msra.mxu0 %v38
    %736 = vmatprep.subr.mxu0 %v43
    %737 = vmatpush1.msra.mxu0 %v42
    %738 = vmatprep.subr.mxu0 %v47
    %739 = vmatpush1.msra.mxu0 %v46
    %740 = vmatprep.subr.mxu0 %v51
    %741 = vmatpush1.msra.mxu0 %v50
    %742 = vmatprep.subr.mxu0 %v55
    %743 = vmatpush1.msra.mxu0 %v54
    %744 = vmatprep.subr.mxu0 %v59
    %745 = vmatpush1.msra.mxu0 %v58
    %746 = vmatprep.subr.mxu0 %v63
    %747 = vmatpush1.msra.mxu0 %v62
    %748 = vmatprep.subr.mxu0 %v67
    %749 = vmatpush1.msra.mxu0 %v66
    %750 = vmatprep.subr.mxu0 %v71
    %751 = vmatpush1.msra.mxu0 %v70
    %752 = vmatprep.subr.mxu0 %v75
    %753 = vmatpush1.msra.mxu0 %v74
    %754 = vmatprep.subr.mxu0 %v79
    %755 = vmatpush1.msra.mxu0 %v78
    %756 = vmatprep.subr.mxu0 %v83
    %757 = vmatpush1.msra.mxu0 %v82
    %758 = vmatprep.subr.mxu0 %v87
    %759 = vmatpush1.msra.mxu0 %v86
    %760 = vmatprep.subr.mxu0 %v91
    %761 = vmatpush1.msra.mxu0 %v90
    %762 = vmatprep.subr.mxu0 %v95
    %763 = vmatpush1.msra.mxu0 %v94
    %764 = vmatprep.subr.mxu0 0.0
    %765 = vmatpush1.msra.mxu0 0.0
    %766 = vmatprep.subr.mxu0 0.0
    %767 = vmatpush1.msra.mxu0 0.0
    %768 = vmatprep.subr.mxu0 0.0
    %769 = vmatpush1.msra.mxu0 0.0
    %770 = vmatprep.subr.mxu0 0.0
    %771 = vmatpush1.msra.mxu0 0.0
    %772 = vmatprep.subr.mxu0 0.0
    %773 = vmatpush1.msra.mxu0 0.0
    %774 = vmatprep.subr.mxu0 0.0
    %775 = vmatpush1.msra.mxu0 0.0
    %776 = vmatprep.subr.mxu0 0.0
    %777 = vmatpush1.msra.mxu0 0.0
    %778 = vmatprep.subr.mxu0 0.0
    %779 = vmatpush1.msra.mxu0 0.0
    %780 = vmatprep.subr.mxu0 0.0
    %781 = vmatpush1.msra.mxu0 0.0
    %782 = vmatprep.subr.mxu0 0.0
    %783 = vmatpush1.msra.mxu0 0.0
    %784 = vmatprep.subr.mxu0 0.0
    %785 = vmatpush1.msra.mxu0 0.0
    %786 = vmatprep.subr.mxu0 0.0
    %787 = vmatpush1.msra.mxu0 0.0
    %788 = vmatprep.subr.mxu0 0.0
    %789 = vmatpush1.msra.mxu0 0.0
    %790 = vmatprep.subr.mxu0 0.0
    %791 = vmatpush1.msra.mxu0 0.0
    %792 = vmatprep.subr.mxu0 0.0
    %793 = vmatpush1.msra.mxu0 0.0
    %794 = vmatprep.subr.mxu0 0.0
    %795 = vmatpush1.msra.mxu0 0.0
    %796 = vmatprep.mubr.f32.mxu0 0.0
    %797 = vmatmul.mubr.f32.gmra.mrb[0].mxu0 %v729
    %v798 = vpop.f32.mrb[0].mxu0
    %v799 = vadd.f32 0.0, %v798
    %v800 = vpop.f32.mrb[0].mxu0
    %v801 = vadd.f32 0.0, %v800
    %802 = vdwg.mxu0
    %803 = vmatprep.subr.mxu0 %v37
    %804 = vmatpush1.msra.mxu0 %v36
    %805 = vmatprep.subr.mxu0 %v41
    %806 = vmatpush1.msra.mxu0 %v40
    %807 = vmatprep.subr.mxu0 %v45
    %808 = vmatpush1.msra.mxu0 %v44
    %809 = vmatprep.subr.mxu0 %v49
    %810 = vmatpush1.msra.mxu0 %v48
    %811 = vmatprep.subr.mxu0 %v53
    %812 = vmatpush1.msra.mxu0 %v52
    %813 = vmatprep.subr.mxu0 %v57
    %814 = vmatpush1.msra.mxu0 %v56
    %815 = vmatprep.subr.mxu0 %v61
    %816 = vmatpush1.msra.mxu0 %v60
    %817 = vmatprep.subr.mxu0 %v65
    %818 = vmatpush1.msra.mxu0 %v64
    %819 = vmatprep.subr.mxu0 %v69
    %820 = vmatpush1.msra.mxu0 %v68
    %821 = vmatprep.subr.mxu0 %v73
    %822 = vmatpush1.msra.mxu0 %v72
    %823 = vmatprep.subr.mxu0 %v77
    %824 = vmatpush1.msra.mxu0 %v76
    %825 = vmatprep.subr.mxu0 %v81
    %826 = vmatpush1.msra.mxu0 %v80
    %827 = vmatprep.subr.mxu0 %v85
    %828 = vmatpush1.msra.mxu0 %v84
    %829 = vmatprep.subr.mxu0 %v89
    %830 = vmatpush1.msra.mxu0 %v88
    %831 = vmatprep.subr.mxu0 %v93
    %832 = vmatpush1.msra.mxu0 %v92
    %833 = vmatprep.subr.mxu0 %v97
    %834 = vmatpush1.msra.mxu0 %v96
    %835 = vmatprep.subr.mxu0 0.0
    %836 = vmatpush1.msra.mxu0 0.0
    %837 = vmatprep.subr.mxu0 0.0
    %838 = vmatpush1.msra.mxu0 0.0
    %839 = vmatprep.subr.mxu0 0.0
    %840 = vmatpush1.msra.mxu0 0.0
    %841 = vmatprep.subr.mxu0 0.0
    %842 = vmatpush1.msra.mxu0 0.0
    %843 = vmatprep.subr.mxu0 0.0
    %844 = vmatpush1.msra.mxu0 0.0
    %845 = vmatprep.subr.mxu0 0.0
    %846 = vmatpush1.msra.mxu0 0.0
    %847 = vmatprep.subr.mxu0 0.0
    %848 = vmatpush1.msra.mxu0 0.0
    %849 = vmatprep.subr.mxu0 0.0
    %850 = vmatpush1.msra.mxu0 0.0
    %851 = vmatprep.subr.mxu0 0.0
    %852 = vmatpush1.msra.mxu0 0.0
    %853 = vmatprep.subr.mxu0 0.0
    %854 = vmatpush1.msra.mxu0 0.0
    %855 = vmatprep.subr.mxu0 0.0
    %856 = vmatpush1.msra.mxu0 0.0
    %857 = vmatprep.subr.mxu0 0.0
    %858 = vmatpush1.msra.mxu0 0.0
    %859 = vmatprep.subr.mxu0 0.0
    %860 = vmatpush1.msra.mxu0 0.0
    %861 = vmatprep.subr.mxu0 0.0
    %862 = vmatpush1.msra.mxu0 0.0
    %863 = vmatprep.subr.mxu0 0.0
    %864 = vmatpush1.msra.mxu0 0.0
    %865 = vmatprep.subr.mxu0 0.0
    %866 = vmatpush1.msra.mxu0 0.0
    %867 = vmatprep.mubr.f32.mxu0 0.0
    %868 = vmatmul.mubr.f32.gmra.mrb[0].mxu0 %v729
    %v869 = vpop.f32.mrb[0].mxu0
    %v870 = vadd.f32 0.0, %v869
    %v871 = vpop.f32.mrb[0].mxu0
    %v872 = vadd.f32 0.0, %v871
    %873 = vdwg.mxu0
    %v875 = vsel %vm247, %v731, 0
    %877 = vmatprep.subr.mxu0 %v99
    %878 = vmatpush1.msra.mxu0 %v98
    %879 = vmatprep.subr.mxu0 0.0
    %880 = vmatpush1.msra.mxu0 0.0
    %881 = vmatprep.subr.mxu0 0.0
    %882 = vmatpush1.msra.mxu0 0.0
    %883 = vmatprep.subr.mxu0 0.0
    %884 = vmatpush1.msra.mxu0 0.0
    %885 = vmatprep.subr.mxu0 0.0
    %886 = vmatpush1.msra.mxu0 0.0
    %887 = vmatprep.subr.mxu0 0.0
    %888 = vmatpush1.msra.mxu0 0.0
    %889 = vmatprep.subr.mxu0 0.0
    %890 = vmatpush1.msra.mxu0 0.0
    %891 = vmatprep.subr.mxu0 0.0
    %892 = vmatpush1.msra.mxu0 0.0
    %893 = vmatprep.subr.mxu0 0.0
    %894 = vmatpush1.msra.mxu0 0.0
    %895 = vmatprep.subr.mxu0 0.0
    %896 = vmatpush1.msra.mxu0 0.0
    %897 = vmatprep.subr.mxu0 0.0
    %898 = vmatpush1.msra.mxu0 0.0
    %899 = vmatprep.subr.mxu0 0.0
    %900 = vmatpush1.msra.mxu0 0.0
    %901 = vmatprep.subr.mxu0 0.0
    %902 = vmatpush1.msra.mxu0 0.0
    %903 = vmatprep.subr.mxu0 0.0
    %904 = vmatpush1.msra.mxu0 0.0
    %905 = vmatprep.subr.mxu0 0.0
    %906 = vmatpush1.msra.mxu0 0.0
    %907 = vmatprep.subr.mxu0 0.0
    %908 = vmatpush1.msra.mxu0 0.0
    %909 = vmatprep.subr.mxu0 0.0
    %910 = vmatpush1.msra.mxu0 0.0
    %911 = vmatprep.subr.mxu0 0.0
    %912 = vmatpush1.msra.mxu0 0.0
    %913 = vmatprep.subr.mxu0 0.0
    %914 = vmatpush1.msra.mxu0 0.0
    %915 = vmatprep.subr.mxu0 0.0
    %916 = vmatpush1.msra.mxu0 0.0
    %917 = vmatprep.subr.mxu0 0.0
    %918 = vmatpush1.msra.mxu0 0.0
    %919 = vmatprep.subr.mxu0 0.0
    %920 = vmatpush1.msra.mxu0 0.0
    %921 = vmatprep.subr.mxu0 0.0
    %922 = vmatpush1.msra.mxu0 0.0
    %923 = vmatprep.subr.mxu0 0.0
    %924 = vmatpush1.msra.mxu0 0.0
    %925 = vmatprep.subr.mxu0 0.0
    %926 = vmatpush1.msra.mxu0 0.0
    %927 = vmatprep.subr.mxu0 0.0
    %928 = vmatpush1.msra.mxu0 0.0
    %929 = vmatprep.subr.mxu0 0.0
    %930 = vmatpush1.msra.mxu0 0.0
    %931 = vmatprep.subr.mxu0 0.0
    %932 = vmatpush1.msra.mxu0 0.0
    %933 = vmatprep.subr.mxu0 0.0
    %934 = vmatpush1.msra.mxu0 0.0
    %935 = vmatprep.subr.mxu0 0.0
    %936 = vmatpush1.msra.mxu0 0.0
    %937 = vmatprep.subr.mxu0 0.0
    %938 = vmatpush1.msra.mxu0 0.0
    %939 = vmatprep.subr.mxu0 0.0
    %940 = vmatpush1.msra.mxu0 0.0
    %941 = vmatprep.mubr.f32.mxu0 0.0
    %942 = vmatmul.mubr.f32.gmra.mrb[0].mxu0 %v875
    %v943 = vpop.f32.mrb[0].mxu0
    %v944 = vadd.f32 %v799, %v943
    %v945 = vpop.f32.mrb[0].mxu0
    %v946 = vadd.f32 %v801, %v945
    %947 = vdwg.mxu0
    %948 = vmatprep.subr.mxu0 %v101
    %949 = vmatpush1.msra.mxu0 %v100
    %950 = vmatprep.subr.mxu0 0.0
    %951 = vmatpush1.msra.mxu0 0.0
    %952 = vmatprep.subr.mxu0 0.0
    %953 = vmatpush1.msra.mxu0 0.0
    %954 = vmatprep.subr.mxu0 0.0
    %955 = vmatpush1.msra.mxu0 0.0
    %956 = vmatprep.subr.mxu0 0.0
    %957 = vmatpush1.msra.mxu0 0.0
    %958 = vmatprep.subr.mxu0 0.0
    %959 = vmatpush1.msra.mxu0 0.0
    %960 = vmatprep.subr.mxu0 0.0
    %961 = vmatpush1.msra.mxu0 0.0
    %962 = vmatprep.subr.mxu0 0.0
    %963 = vmatpush1.msra.mxu0 0.0
    %964 = vmatprep.subr.mxu0 0.0
    %965 = vmatpush1.msra.mxu0 0.0
    %966 = vmatprep.subr.mxu0 0.0
    %967 = vmatpush1.msra.mxu0 0.0
    %968 = vmatprep.subr.mxu0 0.0
    %969 = vmatpush1.msra.mxu0 0.0
    %970 = vmatprep.subr.mxu0 0.0
    %971 = vmatpush1.msra.mxu0 0.0
    %972 = vmatprep.subr.mxu0 0.0
    %973 = vmatpush1.msra.mxu0 0.0
    %974 = vmatprep.subr.mxu0 0.0
    %975 = vmatpush1.msra.mxu0 0.0
    %976 = vmatprep.subr.mxu0 0.0
    %977 = vmatpush1.msra.mxu0 0.0
    %978 = vmatprep.subr.mxu0 0.0
    %979 = vmatpush1.msra.mxu0 0.0
    %980 = vmatprep.subr.mxu0 0.0
    %981 = vmatpush1.msra.mxu0 0.0
    %982 = vmatprep.subr.mxu0 0.0
    %983 = vmatpush1.msra.mxu0 0.0
    %984 = vmatprep.subr.mxu0 0.0
    %985 = vmatpush1.msra.mxu0 0.0
    %986 = vmatprep.subr.mxu0 0.0
    %987 = vmatpush1.msra.mxu0 0.0
    %988 = vmatprep.subr.mxu0 0.0
    %989 = vmatpush1.msra.mxu0 0.0
    %990 = vmatprep.subr.mxu0 0.0
    %991 = vmatpush1.msra.mxu0 0.0
    %992 = vmatprep.subr.mxu0 0.0
    %993 = vmatpush1.msra.mxu0 0.0
    %994 = vmatprep.subr.mxu0 0.0
    %995 = vmatpush1.msra.mxu0 0.0
    %996 = vmatprep.subr.mxu0 0.0
    %997 = vmatpush1.msra.mxu0 0.0
    %998 = vmatprep.subr.mxu0 0.0
    %999 = vmatpush1.msra.mxu0 0.0
    %1000 = vmatprep.subr.mxu0 0.0
    %1001 = vmatpush1.msra.mxu0 0.0
    %1002 = vmatprep.subr.mxu0 0.0
    %1003 = vmatpush1.msra.mxu0 0.0
    %1004 = vmatprep.subr.mxu0 0.0
    %1005 = vmatpush1.msra.mxu0 0.0
    %1006 = vmatprep.subr.mxu0 0.0
    %1007 = vmatpush1.msra.mxu0 0.0
    %1008 = vmatprep.subr.mxu0 0.0
    %1009 = vmatpush1.msra.mxu0 0.0
    %1010 = vmatprep.subr.mxu0 0.0
    %1011 = vmatpush1.msra.mxu0 0.0
    %1012 = vmatprep.mubr.f32.mxu0 0.0
    %1013 = vmatmul.mubr.f32.gmra.mrb[0].mxu0 %v875
    %v1014 = vpop.f32.mrb[0].mxu0
    %v1015 = vadd.f32 %v870, %v1014
    %v1016 = vpop.f32.mrb[0].mxu0
    %v1017 = vadd.f32 %v872, %v1016
    %1018 = vdwg.mxu0
    %v1019 = vxor.u32 %v944, 2147483648
    %v1020 = vmul.f32 %v1019, 1.442695
    %v1021 = vpow.pop %v1020
    %v1022 = vadd.f32 %v1021, 1.0
    %v1023 = vrcp.pop %v1022
    %v1024 = vmul.f32 1.0, %v1023
    %v1025 = vxor.u32 %v946, 2147483648
    %v1026 = vmul.f32 %v1025, 1.442695
    %v1027 = vpow.pop %v1026
    %v1028 = vadd.f32 %v1027, 1.0
    %v1029 = vrcp.pop %v1028
    %v1030 = vmul.f32 1.0, %v1029
    %v1031 = vtanh.pop %v1015
    %v1032 = vxor.u32 %v1017, 2147483648
    %v1033 = vmul.f32 %v1032, 1.442695
    %v1034 = vpow.pop %v1033
    %v1035 = vadd.f32 %v1034, 1.0
    %v1036 = vrcp.pop %v1035
    %v1037 = vmul.f32 1.0, %v1036
    %v1038 = vmul.f32 %v1030, %v727
    %v1039 = vmul.f32 %v1024, %v1031
    %v1040 = vadd.f32 %v1038, %v1039
    %v1041 = vtanh.pop %v1040
    %v1042 = vmul.f32 %v1037, %v1041
    %s1043 = scalar_lea.vmem %s0, 24
    %v1044 = vld [vmem:[%s1043] sm:$0xff]
    %1045 = vmatprep.subr.mxu0 %v35
    %1046 = vmatpush1.msra.mxu0 %v34
    %1047 = vmatprep.subr.mxu0 %v39
    %1048 = vmatpush1.msra.mxu0 %v38
    %1049 = vmatprep.subr.mxu0 %v43
    %1050 = vmatpush1.msra.mxu0 %v42
    %1051 = vmatprep.subr.mxu0 %v47
    %1052 = vmatpush1.msra.mxu0 %v46
    %1053 = vmatprep.subr.mxu0 %v51
    %1054 = vmatpush1.msra.mxu0 %v50
    %1055 = vmatprep.subr.mxu0 %v55
    %1056 = vmatpush1.msra.mxu0 %v54
    %1057 = vmatprep.subr.mxu0 %v59
    %1058 = vmatpush1.msra.mxu0 %v58
    %1059 = vmatprep.subr.mxu0 %v63
    %1060 = vmatpush1.msra.mxu0 %v62
    %1061 = vmatprep.subr.mxu0 %v67
    %1062 = vmatpush1.msra.mxu0 %v66
    %1063 = vmatprep.subr.mxu0 %v71
    %1064 = vmatpush1.msra.mxu0 %v70
    %1065 = vmatprep.subr.mxu0 %v75
    %1066 = vmatpush1.msra.mxu0 %v74
    %1067 = vmatprep.subr.mxu0 %v79
    %1068 = vmatpush1.msra.mxu0 %v78
    %1069 = vmatprep.subr.mxu0 %v83
    %1070 = vmatpush1.msra.mxu0 %v82
    %1071 = vmatprep.subr.mxu0 %v87
    %1072 = vmatpush1.msra.mxu0 %v86
    %1073 = vmatprep.subr.mxu0 %v91
    %1074 = vmatpush1.msra.mxu0 %v90
    %1075 = vmatprep.subr.mxu0 %v95
    %1076 = vmatpush1.msra.mxu0 %v94
    %1077 = vmatprep.subr.mxu0 0.0
    %1078 = vmatpush1.msra.mxu0 0.0
    %1079 = vmatprep.subr.mxu0 0.0
    %1080 = vmatpush1.msra.mxu0 0.0
    %1081 = vmatprep.subr.mxu0 0.0
    %1082 = vmatpush1.msra.mxu0 0.0
    %1083 = vmatprep.subr.mxu0 0.0
    %1084 = vmatpush1.msra.mxu0 0.0
    %1085 = vmatprep.subr.mxu0 0.0
    %1086 = vmatpush1.msra.mxu0 0.0
    %1087 = vmatprep.subr.mxu0 0.0
    %1088 = vmatpush1.msra.mxu0 0.0
    %1089 = vmatprep.subr.mxu0 0.0
    %1090 = vmatpush1.msra.mxu0 0.0
    %1091 = vmatprep.subr.mxu0 0.0
    %1092 = vmatpush1.msra.mxu0 0.0
    %1093 = vmatprep.subr.mxu0 0.0
    %1094 = vmatpush1.msra.mxu0 0.0
    %1095 = vmatprep.subr.mxu0 0.0
    %1096 = vmatpush1.msra.mxu0 0.0
    %1097 = vmatprep.subr.mxu0 0.0
    %1098 = vmatpush1.msra.mxu0 0.0
    %1099 = vmatprep.subr.mxu0 0.0
    %1100 = vmatpush1.msra.mxu0 0.0
    %1101 = vmatprep.subr.mxu0 0.0
    %1102 = vmatpush1.msra.mxu0 0.0
    %1103 = vmatprep.subr.mxu0 0.0
    %1104 = vmatpush1.msra.mxu0 0.0
    %1105 = vmatprep.subr.mxu0 0.0
    %1106 = vmatpush1.msra.mxu0 0.0
    %1107 = vmatprep.subr.mxu0 0.0
    %1108 = vmatpush1.msra.mxu0 0.0
    %1109 = vmatprep.mubr.f32.mxu0 0.0
    %1110 = vmatmul.mubr.f32.gmra.mrb[0].mxu0 %v1042
    %v1111 = vpop.f32.mrb[0].mxu0
    %v1112 = vadd.f32 0.0, %v1111
    %v1113 = vpop.f32.mrb[0].mxu0
    %v1114 = vadd.f32 0.0, %v1113
    %1115 = vdwg.mxu0
    %1116 = vmatprep.subr.mxu0 %v37
    %1117 = vmatpush1.msra.mxu0 %v36
    %1118 = vmatprep.subr.mxu0 %v41
    %1119 = vmatpush1.msra.mxu0 %v40
    %1120 = vmatprep.subr.mxu0 %v45
    %1121 = vmatpush1.msra.mxu0 %v44
    %1122 = vmatprep.subr.mxu0 %v49
    %1123 = vmatpush1.msra.mxu0 %v48
    %1124 = vmatprep.subr.mxu0 %v53
    %1125 = vmatpush1.msra.mxu0 %v52
    %1126 = vmatprep.subr.mxu0 %v57
    %1127 = vmatpush1.msra.mxu0 %v56
    %1128 = vmatprep.subr.mxu0 %v61
    %1129 = vmatpush1.msra.mxu0 %v60
    %1130 = vmatprep.subr.mxu0 %v65
    %1131 = vmatpush1.msra.mxu0 %v64
    %1132 = vmatprep.subr.mxu0 %v69
    %1133 = vmatpush1.msra.mxu0 %v68
    %1134 = vmatprep.subr.mxu0 %v73
    %1135 = vmatpush1.msra.mxu0 %v72
    %1136 = vmatprep.subr.mxu0 %v77
    %1137 = vmatpush1.msra.mxu0 %v76
    %1138 = vmatprep.subr.mxu0 %v81
    %1139 = vmatpush1.msra.mxu0 %v80
    %1140 = vmatprep.subr.mxu0 %v85
    %1141 = vmatpush1.msra.mxu0 %v84
    %1142 = vmatprep.subr.mxu0 %v89
    %1143 = vmatpush1.msra.mxu0 %v88
    %1144 = vmatprep.subr.mxu0 %v93
    %1145 = vmatpush1.msra.mxu0 %v92
    %1146 = vmatprep.subr.mxu0 %v97
    %1147 = vmatpush1.msra.mxu0 %v96
    %1148 = vmatprep.subr.mxu0 0.0
    %1149 = vmatpush1.msra.mxu0 0.0
    %1150 = vmatprep.subr.mxu0 0.0
    %1151 = vmatpush1.msra.mxu0 0.0
    %1152 = vmatprep.subr.mxu0 0.0
    %1153 = vmatpush1.msra.mxu0 0.0
    %1154 = vmatprep.subr.mxu0 0.0
    %1155 = vmatpush1.msra.mxu0 0.0
    %1156 = vmatprep.subr.mxu0 0.0
    %1157 = vmatpush1.msra.mxu0 0.0
    %1158 = vmatprep.subr.mxu0 0.0
    %1159 = vmatpush1.msra.mxu0 0.0
    %1160 = vmatprep.subr.mxu0 0.0
    %1161 = vmatpush1.msra.mxu0 0.0
    %1162 = vmatprep.subr.mxu0 0.0
    %1163 = vmatpush1.msra.mxu0 0.0
    %1164 = vmatprep.subr.mxu0 0.0
    %1165 = vmatpush1.msra.mxu0 0.0
    %1166 = vmatprep.subr.mxu0 0.0
    %1167 = vmatpush1.msra.mxu0 0.0
    %1168 = vmatprep.subr.mxu0 0.0
    %1169 = vmatpush1.msra.mxu0 0.0
    %1170 = vmatprep.subr.mxu0 0.0
    %1171 = vmatpush1.msra.mxu0 0.0
    %1172 = vmatprep.subr.mxu0 0.0
    %1173 = vmatpush1.msra.mxu0 0.0
    %1174 = vmatprep.subr.mxu0 0.0
    %1175 = vmatpush1.msra.mxu0 0.0
    %1176 = vmatprep.subr.mxu0 0.0
    %1177 = vmatpush1.msra.mxu0 0.0
    %1178 = vmatprep.subr.mxu0 0.0
    %1179 = vmatpush1.msra.mxu0 0.0
    %1180 = vmatprep.mubr.f32.mxu0 0.0
    %1181 = vmatmul.mubr.f32.gmra.mrb[0].mxu0 %v1042
    %v1182 = vpop.f32.mrb[0].mxu0
    %v1183 = vadd.f32 0.0, %v1182
    %v1184 = vpop.f32.mrb[0].mxu0
    %v1185 = vadd.f32 0.0, %v1184
    %1186 = vdwg.mxu0
    %v1188 = vsel %vm247, %v1044, 0
    %1190 = vmatprep.subr.mxu0 %v99
    %1191 = vmatpush1.msra.mxu0 %v98
    %1192 = vmatprep.subr.mxu0 0.0
    %1193 = vmatpush1.msra.mxu0 0.0
    %1194 = vmatprep.subr.mxu0 0.0
    %1195 = vmatpush1.msra.mxu0 0.0
    %1196 = vmatprep.subr.mxu0 0.0
    %1197 = vmatpush1.msra.mxu0 0.0
    %1198 = vmatprep.subr.mxu0 0.0
    %1199 = vmatpush1.msra.mxu0 0.0
    %1200 = vmatprep.subr.mxu0 0.0
    %1201 = vmatpush1.msra.mxu0 0.0
    %1202 = vmatprep.subr.mxu0 0.0
    %1203 = vmatpush1.msra.mxu0 0.0
    %1204 = vmatprep.subr.mxu0 0.0
    %1205 = vmatpush1.msra.mxu0 0.0
    %1206 = vmatprep.subr.mxu0 0.0
    %1207 = vmatpush1.msra.mxu0 0.0
    %1208 = vmatprep.subr.mxu0 0.0
    %1209 = vmatpush1.msra.mxu0 0.0
    %1210 = vmatprep.subr.mxu0 0.0
    %1211 = vmatpush1.msra.mxu0 0.0
    %1212 = vmatprep.subr.mxu0 0.0
    %1213 = vmatpush1.msra.mxu0 0.0
    %1214 = vmatprep.subr.mxu0 0.0
    %1215 = vmatpush1.msra.mxu0 0.0
    %1216 = vmatprep.subr.mxu0 0.0
    %1217 = vmatpush1.msra.mxu0 0.0
    %1218 = vmatprep.subr.mxu0 0.0
    %1219 = vmatpush1.msra.mxu0 0.0
    %1220 = vmatprep.subr.mxu0 0.0
    %1221 = vmatpush1.msra.mxu0 0.0
    %1222 = vmatprep.subr.mxu0 0.0
    %1223 = vmatpush1.msra.mxu0 0.0
    %1224 = vmatprep.subr.mxu0 0.0
    %1225 = vmatpush1.msra.mxu0 0.0
    %1226 = vmatprep.subr.mxu0 0.0
    %1227 = vmatpush1.msra.mxu0 0.0
    %1228 = vmatprep.subr.mxu0 0.0
    %1229 = vmatpush1.msra.mxu0 0.0
    %1230 = vmatprep.subr.mxu0 0.0
    %1231 = vmatpush1.msra.mxu0 0.0
    %1232 = vmatprep.subr.mxu0 0.0
    %1233 = vmatpush1.msra.mxu0 0.0
    %1234 = vmatprep.subr.mxu0 0.0
    %1235 = vmatpush1.msra.mxu0 0.0
    %1236 = vmatprep.subr.mxu0 0.0
    %1237 = vmatpush1.msra.mxu0 0.0
    %1238 = vmatprep.subr.mxu0 0.0
    %1239 = vmatpush1.msra.mxu0 0.0
    %1240 = vmatprep.subr.mxu0 0.0
    %1241 = vmatpush1.msra.mxu0 0.0
    %1242 = vmatprep.subr.mxu0 0.0
    %1243 = vmatpush1.msra.mxu0 0.0
    %1244 = vmatprep.subr.mxu0 0.0
    %1245 = vmatpush1.msra.mxu0 0.0
    %1246 = vmatprep.subr.mxu0 0.0
    %1247 = vmatpush1.msra.mxu0 0.0
    %1248 = vmatprep.subr.mxu0 0.0
    %1249 = vmatpush1.msra.mxu0 0.0
    %1250 = vmatprep.subr.mxu0 0.0
    %1251 = vmatpush1.msra.mxu0 0.0
    %1252 = vmatprep.subr.mxu0 0.0
    %1253 = vmatpush1.msra.mxu0 0.0
    %1254 = vmatprep.mubr.f32.mxu0 0.0
    %1255 = vmatmul.mubr.f32.gmra.mrb[0].mxu0 %v1188
    %v1256 = vpop.f32.mrb[0].mxu0
    %v1257 = vadd.f32 %v1112, %v1256
    %v1258 = vpop.f32.mrb[0].mxu0
    %v1259 = vadd.f32 %v1114, %v1258
    %1260 = vdwg.mxu0
    %1261 = vmatprep.subr.mxu0 %v101
    %1262 = vmatpush1.msra.mxu0 %v100
    %1263 = vmatprep.subr.mxu0 0.0
    %1264 = vmatpush1.msra.mxu0 0.0
    %1265 = vmatprep.subr.mxu0 0.0
    %1266 = vmatpush1.msra.mxu0 0.0
    %1267 = vmatprep.subr.mxu0 0.0
    %1268 = vmatpush1.msra.mxu0 0.0
    %1269 = vmatprep.subr.mxu0 0.0
    %1270 = vmatpush1.msra.mxu0 0.0
    %1271 = vmatprep.subr.mxu0 0.0
    %1272 = vmatpush1.msra.mxu0 0.0
    %1273 = vmatprep.subr.mxu0 0.0
    %1274 = vmatpush1.msra.mxu0 0.0
    %1275 = vmatprep.subr.mxu0 0.0
    %1276 = vmatpush1.msra.mxu0 0.0
    %1277 = vmatprep.subr.mxu0 0.0
    %1278 = vmatpush1.msra.mxu0 0.0
    %1279 = vmatprep.subr.mxu0 0.0
    %1280 = vmatpush1.msra.mxu0 0.0
    %1281 = vmatprep.subr.mxu0 0.0
    %1282 = vmatpush1.msra.mxu0 0.0
    %1283 = vmatprep.subr.mxu0 0.0
    %1284 = vmatpush1.msra.mxu0 0.0
    %1285 = vmatprep.subr.mxu0 0.0
    %1286 = vmatpush1.msra.mxu0 0.0
    %1287 = vmatprep.subr.mxu0 0.0
    %1288 = vmatpush1.msra.mxu0 0.0
    %1289 = vmatprep.subr.mxu0 0.0
    %1290 = vmatpush1.msra.mxu0 0.0
    %1291 = vmatprep.subr.mxu0 0.0
    %1292 = vmatpush1.msra.mxu0 0.0
    %1293 = vmatprep.subr.mxu0 0.0
    %1294 = vmatpush1.msra.mxu0 0.0
    %1295 = vmatprep.subr.mxu0 0.0
    %1296 = vmatpush1.msra.mxu0 0.0
    %1297 = vmatprep.subr.mxu0 0.0
    %1298 = vmatpush1.msra.mxu0 0.0
    %1299 = vmatprep.subr.mxu0 0.0
    %1300 = vmatpush1.msra.mxu0 0.0
    %1301 = vmatprep.subr.mxu0 0.0
    %1302 = vmatpush1.msra.mxu0 0.0
    %1303 = vmatprep.subr.mxu0 0.0
    %1304 = vmatpush1.msra.mxu0 0.0
    %1305 = vmatprep.subr.mxu0 0.0
    %1306 = vmatpush1.msra.mxu0 0.0
    %1307 = vmatprep.subr.mxu0 0.0
    %1308 = vmatpush1.msra.mxu0 0.0
    %1309 = vmatprep.subr.mxu0 0.0
    %1310 = vmatpush1.msra.mxu0 0.0
    %1311 = vmatprep.subr.mxu0 0.0
    %1312 = vmatpush1.msra.mxu0 0.0
    %1313 = vmatprep.subr.mxu0 0.0
    %1314 = vmatpush1.msra.mxu0 0.0
    %1315 = vmatprep.subr.mxu0 0.0
    %1316 = vmatpush1.msra.mxu0 0.0
    %1317 = vmatprep.subr.mxu0 0.0
    %1318 = vmatpush1.msra.mxu0 0.0
    %1319 = vmatprep.subr.mxu0 0.0
    %1320 = vmatpush1.msra.mxu0 0.0
    %1321 = vmatprep.subr.mxu0 0.0
    %1322 = vmatpush1.msra.mxu0 0.0
    %1323 = vmatprep.subr.mxu0 0.0
    %1324 = vmatpush1.msra.mxu0 0.0
    %1325 = vmatprep.mubr.f32.mxu0 0.0
    %1326 = vmatmul.mubr.f32.gmra.mrb[0].mxu0 %v1188
    %v1327 = vpop.f32.mrb[0].mxu0
    %v1328 = vadd.f32 %v1183, %v1327
    %v1329 = vpop.f32.mrb[0].mxu0
    %v1330 = vadd.f32 %v1185, %v1329
    %1331 = vdwg.mxu0
    %v1332 = vxor.u32 %v1257, 2147483648
    %v1333 = vmul.f32 %v1332, 1.442695
    %v1334 = vpow.pop %v1333
    %v1335 = vadd.f32 %v1334, 1.0
    %v1336 = vrcp.pop %v1335
    %v1337 = vmul.f32 1.0, %v1336
    %v1338 = vxor.u32 %v1259, 2147483648
    %v1339 = vmul.f32 %v1338, 1.442695
    %v1340 = vpow.pop %v1339
    %v1341 = vadd.f32 %v1340, 1.0
    %v1342 = vrcp.pop %v1341
    %v1343 = vmul.f32 1.0, %v1342
    %v1344 = vtanh.pop %v1328
    %v1345 = vxor.u32 %v1330, 2147483648
    %v1346 = vmul.f32 %v1345, 1.442695
    %v1347 = vpow.pop %v1346
    %v1348 = vadd.f32 %v1347, 1.0
    %v1349 = vrcp.pop %v1348
    %v1350 = vmul.f32 1.0, %v1349
    %v1351 = vmul.f32 %v1343, %v1040
    %v1352 = vmul.f32 %v1337, %v1344
    %v1353 = vadd.f32 %v1351, %v1352
    %v1354 = vtanh.pop %v1353
    %v1355 = vmul.f32 %v1350, %v1354
    %s1356 = scalar_lea.vmem %s0, 32
    %v1357 = vld [vmem:[%s1356] sm:$0xff]
    %1358 = vmatprep.subr.mxu0 %v35
    %1359 = vmatpush1.msra.mxu0 %v34
    %1360 = vmatprep.subr.mxu0 %v39
    %1361 = vmatpush1.msra.mxu0 %v38
    %1362 = vmatprep.subr.mxu0 %v43
    %1363 = vmatpush1.msra.mxu0 %v42
    %1364 = vmatprep.subr.mxu0 %v47
    %1365 = vmatpush1.msra.mxu0 %v46
    %1366 = vmatprep.subr.mxu0 %v51
    %1367 = vmatpush1.msra.mxu0 %v50
    %1368 = vmatprep.subr.mxu0 %v55
    %1369 = vmatpush1.msra.mxu0 %v54
    %1370 = vmatprep.subr.mxu0 %v59
    %1371 = vmatpush1.msra.mxu0 %v58
    %1372 = vmatprep.subr.mxu0 %v63
    %1373 = vmatpush1.msra.mxu0 %v62
    %1374 = vmatprep.subr.mxu0 %v67
    %1375 = vmatpush1.msra.mxu0 %v66
    %1376 = vmatprep.subr.mxu0 %v71
    %1377 = vmatpush1.msra.mxu0 %v70
    %1378 = vmatprep.subr.mxu0 %v75
    %1379 = vmatpush1.msra.mxu0 %v74
    %1380 = vmatprep.subr.mxu0 %v79
    %1381 = vmatpush1.msra.mxu0 %v78
    %1382 = vmatprep.subr.mxu0 %v83
    %1383 = vmatpush1.msra.mxu0 %v82
    %1384 = vmatprep.subr.mxu0 %v87
    %1385 = vmatpush1.msra.mxu0 %v86
    %1386 = vmatprep.subr.mxu0 %v91
    %1387 = vmatpush1.msra.mxu0 %v90
    %1388 = vmatprep.subr.mxu0 %v95
    %1389 = vmatpush1.msra.mxu0 %v94
    %1390 = vmatprep.subr.mxu0 0.0
    %1391 = vmatpush1.msra.mxu0 0.0
    %1392 = vmatprep.subr.mxu0 0.0
    %1393 = vmatpush1.msra.mxu0 0.0
    %1394 = vmatprep.subr.mxu0 0.0
    %1395 = vmatpush1.msra.mxu0 0.0
    %1396 = vmatprep.subr.mxu0 0.0
    %1397 = vmatpush1.msra.mxu0 0.0
    %1398 = vmatprep.subr.mxu0 0.0
    %1399 = vmatpush1.msra.mxu0 0.0
    %1400 = vmatprep.subr.mxu0 0.0
    %1401 = vmatpush1.msra.mxu0 0.0
    %1402 = vmatprep.subr.mxu0 0.0
    %1403 = vmatpush1.msra.mxu0 0.0
    %1404 = vmatprep.subr.mxu0 0.0
    %1405 = vmatpush1.msra.mxu0 0.0
    %1406 = vmatprep.subr.mxu0 0.0
    %1407 = vmatpush1.msra.mxu0 0.0
    %1408 = vmatprep.subr.mxu0 0.0
    %1409 = vmatpush1.msra.mxu0 0.0
    %1410 = vmatprep.subr.mxu0 0.0
    %1411 = vmatpush1.msra.mxu0 0.0
    %1412 = vmatprep.subr.mxu0 0.0
    %1413 = vmatpush1.msra.mxu0 0.0
    %1414 = vmatprep.subr.mxu0 0.0
    %1415 = vmatpush1.msra.mxu0 0.0
    %1416 = vmatprep.subr.mxu0 0.0
    %1417 = vmatpush1.msra.mxu0 0.0
    %1418 = vmatprep.subr.mxu0 0.0
    %1419 = vmatpush1.msra.mxu0 0.0
    %1420 = vmatprep.subr.mxu0 0.0
    %1421 = vmatpush1.msra.mxu0 0.0
    %1422 = vmatprep.mubr.f32.mxu0 0.0
    %1423 = vmatmul.mubr.f32.gmra.mrb[0].mxu0 %v1355
    %v1424 = vpop.f32.mrb[0].mxu0
    %v1425 = vadd.f32 0.0, %v1424
    %v1426 = vpop.f32.mrb[0].mxu0
    %v1427 = vadd.f32 0.0, %v1426
    %1428 = vdwg.mxu0
    %1429 = vmatprep.subr.mxu0 %v37
    %1430 = vmatpush1.msra.mxu0 %v36
    %1431 = vmatprep.subr.mxu0 %v41
    %1432 = vmatpush1.msra.mxu0 %v40
    %1433 = vmatprep.subr.mxu0 %v45
    %1434 = vmatpush1.msra.mxu0 %v44
    %1435 = vmatprep.subr.mxu0 %v49
    %1436 = vmatpush1.msra.mxu0 %v48
    %1437 = vmatprep.subr.mxu0 %v53
    %1438 = vmatpush1.msra.mxu0 %v52
    %1439 = vmatprep.subr.mxu0 %v57
    %1440 = vmatpush1.msra.mxu0 %v56
    %1441 = vmatprep.subr.mxu0 %v61
    %1442 = vmatpush1.msra.mxu0 %v60
    %1443 = vmatprep.subr.mxu0 %v65
    %1444 = vmatpush1.msra.mxu0 %v64
    %1445 = vmatprep.subr.mxu0 %v69
    %1446 = vmatpush1.msra.mxu0 %v68
    %1447 = vmatprep.subr.mxu0 %v73
    %1448 = vmatpush1.msra.mxu0 %v72
    %1449 = vmatprep.subr.mxu0 %v77
    %1450 = vmatpush1.msra.mxu0 %v76
    %1451 = vmatprep.subr.mxu0 %v81
    %1452 = vmatpush1.msra.mxu0 %v80
    %1453 = vmatprep.subr.mxu0 %v85
    %1454 = vmatpush1.msra.mxu0 %v84
    %1455 = vmatprep.subr.mxu0 %v89
    %1456 = vmatpush1.msra.mxu0 %v88
    %1457 = vmatprep.subr.mxu0 %v93
    %1458 = vmatpush1.msra.mxu0 %v92
    %1459 = vmatprep.subr.mxu0 %v97
    %1460 = vmatpush1.msra.mxu0 %v96
    %1461 = vmatprep.subr.mxu0 0.0
    %1462 = vmatpush1.msra.mxu0 0.0
    %1463 = vmatprep.subr.mxu0 0.0
    %1464 = vmatpush1.msra.mxu0 0.0
    %1465 = vmatprep.subr.mxu0 0.0
    %1466 = vmatpush1.msra.mxu0 0.0
    %1467 = vmatprep.subr.mxu0 0.0
    %1468 = vmatpush1.msra.mxu0 0.0
    %1469 = vmatprep.subr.mxu0 0.0
    %1470 = vmatpush1.msra.mxu0 0.0
    %1471 = vmatprep.subr.mxu0 0.0
    %1472 = vmatpush1.msra.mxu0 0.0
    %1473 = vmatprep.subr.mxu0 0.0
    %1474 = vmatpush1.msra.mxu0 0.0
    %1475 = vmatprep.subr.mxu0 0.0
    %1476 = vmatpush1.msra.mxu0 0.0
    %1477 = vmatprep.subr.mxu0 0.0
    %1478 = vmatpush1.msra.mxu0 0.0
    %1479 = vmatprep.subr.mxu0 0.0
    %1480 = vmatpush1.msra.mxu0 0.0
    %1481 = vmatprep.subr.mxu0 0.0
    %1482 = vmatpush1.msra.mxu0 0.0
    %1483 = vmatprep.subr.mxu0 0.0
    %1484 = vmatpush1.msra.mxu0 0.0
    %1485 = vmatprep.subr.mxu0 0.0
    %1486 = vmatpush1.msra.mxu0 0.0
    %1487 = vmatprep.subr.mxu0 0.0
    %1488 = vmatpush1.msra.mxu0 0.0
    %1489 = vmatprep.subr.mxu0 0.0
    %1490 = vmatpush1.msra.mxu0 0.0
    %1491 = vmatprep.subr.mxu0 0.0
    %1492 = vmatpush1.msra.mxu0 0.0
    %1493 = vmatprep.mubr.f32.mxu0 0.0
    %1494 = vmatmul.mubr.f32.gmra.mrb[0].mxu0 %v1355
    %v1495 = vpop.f32.mrb[0].mxu0
    %v1496 = vadd.f32 0.0, %v1495
    %v1497 = vpop.f32.mrb[0].mxu0
    %v1498 = vadd.f32 0.0, %v1497
    %1499 = vdwg.mxu0
    %v1501 = vsel %vm247, %v1357, 0
    %1503 = vmatprep.subr.mxu0 %v99
    %1504 = vmatpush1.msra.mxu0 %v98
    %1505 = vmatprep.subr.mxu0 0.0
    %1506 = vmatpush1.msra.mxu0 0.0
    %1507 = vmatprep.subr.mxu0 0.0
    %1508 = vmatpush1.msra.mxu0 0.0
    %1509 = vmatprep.subr.mxu0 0.0
    %1510 = vmatpush1.msra.mxu0 0.0
    %1511 = vmatprep.subr.mxu0 0.0
    %1512 = vmatpush1.msra.mxu0 0.0
    %1513 = vmatprep.subr.mxu0 0.0
    %1514 = vmatpush1.msra.mxu0 0.0
    %1515 = vmatprep.subr.mxu0 0.0
    %1516 = vmatpush1.msra.mxu0 0.0
    %1517 = vmatprep.subr.mxu0 0.0
    %1518 = vmatpush1.msra.mxu0 0.0
    %1519 = vmatprep.subr.mxu0 0.0
    %1520 = vmatpush1.msra.mxu0 0.0
    %1521 = vmatprep.subr.mxu0 0.0
    %1522 = vmatpush1.msra.mxu0 0.0
    %1523 = vmatprep.subr.mxu0 0.0
    %1524 = vmatpush1.msra.mxu0 0.0
    %1525 = vmatprep.subr.mxu0 0.0
    %1526 = vmatpush1.msra.mxu0 0.0
    %1527 = vmatprep.subr.mxu0 0.0
    %1528 = vmatpush1.msra.mxu0 0.0
    %1529 = vmatprep.subr.mxu0 0.0
    %1530 = vmatpush1.msra.mxu0 0.0
    %1531 = vmatprep.subr.mxu0 0.0
    %1532 = vmatpush1.msra.mxu0 0.0
    %1533 = vmatprep.subr.mxu0 0.0
    %1534 = vmatpush1.msra.mxu0 0.0
    %1535 = vmatprep.subr.mxu0 0.0
    %1536 = vmatpush1.msra.mxu0 0.0
    %1537 = vmatprep.subr.mxu0 0.0
    %1538 = vmatpush1.msra.mxu0 0.0
    %1539 = vmatprep.subr.mxu0 0.0
    %1540 = vmatpush1.msra.mxu0 0.0
    %1541 = vmatprep.subr.mxu0 0.0
    %1542 = vmatpush1.msra.mxu0 0.0
    %1543 = vmatprep.subr.mxu0 0.0
    %1544 = vmatpush1.msra.mxu0 0.0
    %1545 = vmatprep.subr.mxu0 0.0
    %1546 = vmatpush1.msra.mxu0 0.0
    %1547 = vmatprep.subr.mxu0 0.0
    %1548 = vmatpush1.msra.mxu0 0.0
    %1549 = vmatprep.subr.mxu0 0.0
    %1550 = vmatpush1.msra.mxu0 0.0
    %1551 = vmatprep.subr.mxu0 0.0
    %1552 = vmatpush1.msra.mxu0 0.0
    %1553 = vmatprep.subr.mxu0 0.0
    %1554 = vmatpush1.msra.mxu0 0.0
    %1555 = vmatprep.subr.mxu0 0.0
    %1556 = vmatpush1.msra.mxu0 0.0
    %1557 = vmatprep.subr.mxu0 0.0
    %1558 = vmatpush1.msra.mxu0 0.0
    %1559 = vmatprep.subr.mxu0 0.0
    %1560 = vmatpush1.msra.mxu0 0.0
    %1561 = vmatprep.subr.mxu0 0.0
    %1562 = vmatpush1.msra.mxu0 0.0
    %1563 = vmatprep.subr.mxu0 0.0
    %1564 = vmatpush1.msra.mxu0 0.0
    %1565 = vmatprep.subr.mxu0 0.0
    %1566 = vmatpush1.msra.mxu0 0.0
    %1567 = vmatprep.mubr.f32.mxu0 0.0
    %1568 = vmatmul.mubr.f32.gmra.mrb[0].mxu0 %v1501
    %v1569 = vpop.f32.mrb[0].mxu0
    %v1570 = vadd.f32 %v1425, %v1569
    %v1571 = vpop.f32.mrb[0].mxu0
    %v1572 = vadd.f32 %v1427, %v1571
    %1573 = vdwg.mxu0
    %1574 = vmatprep.subr.mxu0 %v101
    %1575 = vmatpush1.msra.mxu0 %v100
    %1576 = vmatprep.subr.mxu0 0.0
    %1577 = vmatpush1.msra.mxu0 0.0
    %1578 = vmatprep.subr.mxu0 0.0
    %1579 = vmatpush1.msra.mxu0 0.0
    %1580 = vmatprep.subr.mxu0 0.0
    %1581 = vmatpush1.msra.mxu0 0.0
    %1582 = vmatprep.subr.mxu0 0.0
    %1583 = vmatpush1.msra.mxu0 0.0
    %1584 = vmatprep.subr.mxu0 0.0
    %1585 = vmatpush1.msra.mxu0 0.0
    %1586 = vmatprep.subr.mxu0 0.0
    %1587 = vmatpush1.msra.mxu0 0.0
    %1588 = vmatprep.subr.mxu0 0.0
    %1589 = vmatpush1.msra.mxu0 0.0
    %1590 = vmatprep.subr.mxu0 0.0
    %1591 = vmatpush1.msra.mxu0 0.0
    %1592 = vmatprep.subr.mxu0 0.0
    %1593 = vmatpush1.msra.mxu0 0.0
    %1594 = vmatprep.subr.mxu0 0.0
    %1595 = vmatpush1.msra.mxu0 0.0
    %1596 = vmatprep.subr.mxu0 0.0
    %1597 = vmatpush1.msra.mxu0 0.0
    %1598 = vmatprep.subr.mxu0 0.0
    %1599 = vmatpush1.msra.mxu0 0.0
    %1600 = vmatprep.subr.mxu0 0.0
    %1601 = vmatpush1.msra.mxu0 0.0
    %1602 = vmatprep.subr.mxu0 0.0
    %1603 = vmatpush1.msra.mxu0 0.0
    %1604 = vmatprep.subr.mxu0 0.0
    %1605 = vmatpush1.msra.mxu0 0.0
    %1606 = vmatprep.subr.mxu0 0.0
    %1607 = vmatpush1.msra.mxu0 0.0
    %1608 = vmatprep.subr.mxu0 0.0
    %1609 = vmatpush1.msra.mxu0 0.0
    %1610 = vmatprep.subr.mxu0 0.0
    %1611 = vmatpush1.msra.mxu0 0.0
    %1612 = vmatprep.subr.mxu0 0.0
    %1613 = vmatpush1.msra.mxu0 0.0
    %1614 = vmatprep.subr.mxu0 0.0
    %1615 = vmatpush1.msra.mxu0 0.0
    %1616 = vmatprep.subr.mxu0 0.0
    %1617 = vmatpush1.msra.mxu0 0.0
    %1618 = vmatprep.subr.mxu0 0.0
    %1619 = vmatpush1.msra.mxu0 0.0
    %1620 = vmatprep.subr.mxu0 0.0
    %1621 = vmatpush1.msra.mxu0 0.0
    %1622 = vmatprep.subr.mxu0 0.0
    %1623 = vmatpush1.msra.mxu0 0.0
    %1624 = vmatprep.subr.mxu0 0.0
    %1625 = vmatpush1.msra.mxu0 0.0
    %1626 = vmatprep.subr.mxu0 0.0
    %1627 = vmatpush1.msra.mxu0 0.0
    %1628 = vmatprep.subr.mxu0 0.0
    %1629 = vmatpush1.msra.mxu0 0.0
    %1630 = vmatprep.subr.mxu0 0.0
    %1631 = vmatpush1.msra.mxu0 0.0
    %1632 = vmatprep.subr.mxu0 0.0
    %1633 = vmatpush1.msra.mxu0 0.0
    %1634 = vmatprep.subr.mxu0 0.0
    %1635 = vmatpush1.msra.mxu0 0.0
    %1636 = vmatprep.subr.mxu0 0.0
    %1637 = vmatpush1.msra.mxu0 0.0
    %1638 = vmatprep.mubr.f32.mxu0 0.0
    %1639 = vmatmul.mubr.f32.gmra.mrb[0].mxu0 %v1501
    %v1640 = vpop.f32.mrb[0].mxu0
    %v1641 = vadd.f32 %v1496, %v1640
    %v1642 = vpop.f32.mrb[0].mxu0
    %v1643 = vadd.f32 %v1498, %v1642
    %1644 = vdwg.mxu0
    %v1645 = vxor.u32 %v1570, 2147483648
    %v1646 = vmul.f32 %v1645, 1.442695
    %v1647 = vpow.pop %v1646
    %v1648 = vadd.f32 %v1647, 1.0
    %v1649 = vrcp.pop %v1648
    %v1650 = vmul.f32 1.0, %v1649
    %v1651 = vxor.u32 %v1572, 2147483648
    %v1652 = vmul.f32 %v1651, 1.442695
    %v1653 = vpow.pop %v1652
    %v1654 = vadd.f32 %v1653, 1.0
    %v1655 = vrcp.pop %v1654
    %v1656 = vmul.f32 1.0, %v1655
    %v1657 = vtanh.pop %v1641
    %v1658 = vxor.u32 %v1643, 2147483648
    %v1659 = vmul.f32 %v1658, 1.442695
    %v1660 = vpow.pop %v1659
    %v1661 = vadd.f32 %v1660, 1.0
    %v1662 = vrcp.pop %v1661
    %v1663 = vmul.f32 1.0, %v1662
    %v1664 = vmul.f32 %v1656, %v1353
    %v1665 = vmul.f32 %v1650, %v1657
    %v1666 = vadd.f32 %v1664, %v1665
    %v1667 = vtanh.pop %v1666
    %v1668 = vmul.f32 %v1663, %v1667
    %s1669 = scalar_lea.vmem %s0, 40
    %v1670 = vld [vmem:[%s1669] sm:$0xff]
    %1671 = vmatprep.subr.mxu0 %v35
    %1672 = vmatpush1.msra.mxu0 %v34
    %1673 = vmatprep.subr.mxu0 %v39
    %1674 = vmatpush1.msra.mxu0 %v38
    %1675 = vmatprep.subr.mxu0 %v43
    %1676 = vmatpush1.msra.mxu0 %v42
    %1677 = vmatprep.subr.mxu0 %v47
    %1678 = vmatpush1.msra.mxu0 %v46
    %1679 = vmatprep.subr.mxu0 %v51
    %1680 = vmatpush1.msra.mxu0 %v50
    %1681 = vmatprep.subr.mxu0 %v55
    %1682 = vmatpush1.msra.mxu0 %v54
    %1683 = vmatprep.subr.mxu0 %v59
    %1684 = vmatpush1.msra.mxu0 %v58
    %1685 = vmatprep.subr.mxu0 %v63
    %1686 = vmatpush1.msra.mxu0 %v62
    %1687 = vmatprep.subr.mxu0 %v67
    %1688 = vmatpush1.msra.mxu0 %v66
    %1689 = vmatprep.subr.mxu0 %v71
    %1690 = vmatpush1.msra.mxu0 %v70
    %1691 = vmatprep.subr.mxu0 %v75
    %1692 = vmatpush1.msra.mxu0 %v74
    %1693 = vmatprep.subr.mxu0 %v79
    %1694 = vmatpush1.msra.mxu0 %v78
    %1695 = vmatprep.subr.mxu0 %v83
    %1696 = vmatpush1.msra.mxu0 %v82
    %1697 = vmatprep.subr.mxu0 %v87
    %1698 = vmatpush1.msra.mxu0 %v86
    %1699 = vmatprep.subr.mxu0 %v91
    %1700 = vmatpush1.msra.mxu0 %v90
    %1701 = vmatprep.subr.mxu0 %v95
    %1702 = vmatpush1.msra.mxu0 %v94
    %1703 = vmatprep.subr.mxu0 0.0
    %1704 = vmatpush1.msra.mxu0 0.0
    %1705 = vmatprep.subr.mxu0 0.0
    %1706 = vmatpush1.msra.mxu0 0.0
    %1707 = vmatprep.subr.mxu0 0.0
    %1708 = vmatpush1.msra.mxu0 0.0
    %1709 = vmatprep.subr.mxu0 0.0
    %1710 = vmatpush1.msra.mxu0 0.0
    %1711 = vmatprep.subr.mxu0 0.0
    %1712 = vmatpush1.msra.mxu0 0.0
    %1713 = vmatprep.subr.mxu0 0.0
    %1714 = vmatpush1.msra.mxu0 0.0
    %1715 = vmatprep.subr.mxu0 0.0
    %1716 = vmatpush1.msra.mxu0 0.0
    %1717 = vmatprep.subr.mxu0 0.0
    %1718 = vmatpush1.msra.mxu0 0.0
    %1719 = vmatprep.subr.mxu0 0.0
    %1720 = vmatpush1.msra.mxu0 0.0
    %1721 = vmatprep.subr.mxu0 0.0
    %1722 = vmatpush1.msra.mxu0 0.0
    %1723 = vmatprep.subr.mxu0 0.0
    %1724 = vmatpush1.msra.mxu0 0.0
    %1725 = vmatprep.subr.mxu0 0.0
    %1726 = vmatpush1.msra.mxu0 0.0
    %1727 = vmatprep.subr.mxu0 0.0
    %1728 = vmatpush1.msra.mxu0 0.0
    %1729 = vmatprep.subr.mxu0 0.0
    %1730 = vmatpush1.msra.mxu0 0.0
    %1731 = vmatprep.subr.mxu0 0.0
    %1732 = vmatpush1.msra.mxu0 0.0
    %1733 = vmatprep.subr.mxu0 0.0
    %1734 = vmatpush1.msra.mxu0 0.0
    %1735 = vmatprep.mubr.f32.mxu0 0.0
    %1736 = vmatmul.mubr.f32.gmra.mrb[0].mxu0 %v1668
    %v1737 = vpop.f32.mrb[0].mxu0
    %v1738 = vadd.f32 0.0, %v1737
    %v1739 = vpop.f32.mrb[0].mxu0
    %v1740 = vadd.f32 0.0, %v1739
    %1741 = vdwg.mxu0
    %1742 = vmatprep.subr.mxu0 %v37
    %1743 = vmatpush1.msra.mxu0 %v36
    %1744 = vmatprep.subr.mxu0 %v41
    %1745 = vmatpush1.msra.mxu0 %v40
    %1746 = vmatprep.subr.mxu0 %v45
    %1747 = vmatpush1.msra.mxu0 %v44
    %1748 = vmatprep.subr.mxu0 %v49
    %1749 = vmatpush1.msra.mxu0 %v48
    %1750 = vmatprep.subr.mxu0 %v53
    %1751 = vmatpush1.msra.mxu0 %v52
    %1752 = vmatprep.subr.mxu0 %v57
    %1753 = vmatpush1.msra.mxu0 %v56
    %1754 = vmatprep.subr.mxu0 %v61
    %1755 = vmatpush1.msra.mxu0 %v60
    %1756 = vmatprep.subr.mxu0 %v65
    %1757 = vmatpush1.msra.mxu0 %v64
    %1758 = vmatprep.subr.mxu0 %v69
    %1759 = vmatpush1.msra.mxu0 %v68
    %1760 = vmatprep.subr.mxu0 %v73
    %1761 = vmatpush1.msra.mxu0 %v72
    %1762 = vmatprep.subr.mxu0 %v77
    %1763 = vmatpush1.msra.mxu0 %v76
    %1764 = vmatprep.subr.mxu0 %v81
    %1765 = vmatpush1.msra.mxu0 %v80
    %1766 = vmatprep.subr.mxu0 %v85
    %1767 = vmatpush1.msra.mxu0 %v84
    %1768 = vmatprep.subr.mxu0 %v89
    %1769 = vmatpush1.msra.mxu0 %v88
    %1770 = vmatprep.subr.mxu0 %v93
    %1771 = vmatpush1.msra.mxu0 %v92
    %1772 = vmatprep.subr.mxu0 %v97
    %1773 = vmatpush1.msra.mxu0 %v96
    %1774 = vmatprep.subr.mxu0 0.0
    %1775 = vmatpush1.msra.mxu0 0.0
    %1776 = vmatprep.subr.mxu0 0.0
    %1777 = vmatpush1.msra.mxu0 0.0
    %1778 = vmatprep.subr.mxu0 0.0
    %1779 = vmatpush1.msra.mxu0 0.0
    %1780 = vmatprep.subr.mxu0 0.0
    %1781 = vmatpush1.msra.mxu0 0.0
    %1782 = vmatprep.subr.mxu0 0.0
    %1783 = vmatpush1.msra.mxu0 0.0
    %1784 = vmatprep.subr.mxu0 0.0
    %1785 = vmatpush1.msra.mxu0 0.0
    %1786 = vmatprep.subr.mxu0 0.0
    %1787 = vmatpush1.msra.mxu0 0.0
    %1788 = vmatprep.subr.mxu0 0.0
    %1789 = vmatpush1.msra.mxu0 0.0
    %1790 = vmatprep.subr.mxu0 0.0
    %1791 = vmatpush1.msra.mxu0 0.0
    %1792 = vmatprep.subr.mxu0 0.0
    %1793 = vmatpush1.msra.mxu0 0.0
    %1794 = vmatprep.subr.mxu0 0.0
    %1795 = vmatpush1.msra.mxu0 0.0
    %1796 = vmatprep.subr.mxu0 0.0
    %1797 = vmatpush1.msra.mxu0 0.0
    %1798 = vmatprep.subr.mxu0 0.0
    %1799 = vmatpush1.msra.mxu0 0.0
    %1800 = vmatprep.subr.mxu0 0.0
    %1801 = vmatpush1.msra.mxu0 0.0
    %1802 = vmatprep.subr.mxu0 0.0
    %1803 = vmatpush1.msra.mxu0 0.0
    %1804 = vmatprep.subr.mxu0 0.0
    %1805 = vmatpush1.msra.mxu0 0.0
    %1806 = vmatprep.mubr.f32.mxu0 0.0
    %1807 = vmatmul.mubr.f32.gmra.mrb[0].mxu0 %v1668
    %v1808 = vpop.f32.mrb[0].mxu0
    %v1809 = vadd.f32 0.0, %v1808
    %v1810 = vpop.f32.mrb[0].mxu0
    %v1811 = vadd.f32 0.0, %v1810
    %1812 = vdwg.mxu0
    %v1814 = vsel %vm247, %v1670, 0
    %1816 = vmatprep.subr.mxu0 %v99
    %1817 = vmatpush1.msra.mxu0 %v98
    %1818 = vmatprep.subr.mxu0 0.0
    %1819 = vmatpush1.msra.mxu0 0.0
    %1820 = vmatprep.subr.mxu0 0.0
    %1821 = vmatpush1.msra.mxu0 0.0
    %1822 = vmatprep.subr.mxu0 0.0
    %1823 = vmatpush1.msra.mxu0 0.0
    %1824 = vmatprep.subr.mxu0 0.0
    %1825 = vmatpush1.msra.mxu0 0.0
    %1826 = vmatprep.subr.mxu0 0.0
    %1827 = vmatpush1.msra.mxu0 0.0
    %1828 = vmatprep.subr.mxu0 0.0
    %1829 = vmatpush1.msra.mxu0 0.0
    %1830 = vmatprep.subr.mxu0 0.0
    %1831 = vmatpush1.msra.mxu0 0.0
    %1832 = vmatprep.subr.mxu0 0.0
    %1833 = vmatpush1.msra.mxu0 0.0
    %1834 = vmatprep.subr.mxu0 0.0
    %1835 = vmatpush1.msra.mxu0 0.0
    %1836 = vmatprep.subr.mxu0 0.0
    %1837 = vmatpush1.msra.mxu0 0.0
    %1838 = vmatprep.subr.mxu0 0.0
    %1839 = vmatpush1.msra.mxu0 0.0
    %1840 = vmatprep.subr.mxu0 0.0
    %1841 = vmatpush1.msra.mxu0 0.0
    %1842 = vmatprep.subr.mxu0 0.0
    %1843 = vmatpush1.msra.mxu0 0.0
    %1844 = vmatprep.subr.mxu0 0.0
    %1845 = vmatpush1.msra.mxu0 0.0
    %1846 = vmatprep.subr.mxu0 0.0
    %1847 = vmatpush1.msra.mxu0 0.0
    %1848 = vmatprep.subr.mxu0 0.0
    %1849 = vmatpush1.msra.mxu0 0.0
    %1850 = vmatprep.subr.mxu0 0.0
    %1851 = vmatpush1.msra.mxu0 0.0
    %1852 = vmatprep.subr.mxu0 0.0
    %1853 = vmatpush1.msra.mxu0 0.0
    %1854 = vmatprep.subr.mxu0 0.0
    %1855 = vmatpush1.msra.mxu0 0.0
    %1856 = vmatprep.subr.mxu0 0.0
    %1857 = vmatpush1.msra.mxu0 0.0
    %1858 = vmatprep.subr.mxu0 0.0
    %1859 = vmatpush1.msra.mxu0 0.0
    %1860 = vmatprep.subr.mxu0 0.0
    %1861 = vmatpush1.msra.mxu0 0.0
    %1862 = vmatprep.subr.mxu0 0.0
    %1863 = vmatpush1.msra.mxu0 0.0
    %1864 = vmatprep.subr.mxu0 0.0
    %1865 = vmatpush1.msra.mxu0 0.0
    %1866 = vmatprep.subr.mxu0 0.0
    %1867 = vmatpush1.msra.mxu0 0.0
    %1868 = vmatprep.subr.mxu0 0.0
    %1869 = vmatpush1.msra.mxu0 0.0
    %1870 = vmatprep.subr.mxu0 0.0
    %1871 = vmatpush1.msra.mxu0 0.0
    %1872 = vmatprep.subr.mxu0 0.0
    %1873 = vmatpush1.msra.mxu0 0.0
    %1874 = vmatprep.subr.mxu0 0.0
    %1875 = vmatpush1.msra.mxu0 0.0
    %1876 = vmatprep.subr.mxu0 0.0
    %1877 = vmatpush1.msra.mxu0 0.0
    %1878 = vmatprep.subr.mxu0 0.0
    %1879 = vmatpush1.msra.mxu0 0.0
    %1880 = vmatprep.mubr.f32.mxu0 0.0
    %1881 = vmatmul.mubr.f32.gmra.mrb[0].mxu0 %v1814
    %v1882 = vpop.f32.mrb[0].mxu0
    %v1883 = vadd.f32 %v1738, %v1882
    %v1884 = vpop.f32.mrb[0].mxu0
    %v1885 = vadd.f32 %v1740, %v1884
    %1886 = vdwg.mxu0
    %1887 = vmatprep.subr.mxu0 %v101
    %1888 = vmatpush1.msra.mxu0 %v100
    %1889 = vmatprep.subr.mxu0 0.0
    %1890 = vmatpush1.msra.mxu0 0.0
    %1891 = vmatprep.subr.mxu0 0.0
    %1892 = vmatpush1.msra.mxu0 0.0
    %1893 = vmatprep.subr.mxu0 0.0
    %1894 = vmatpush1.msra.mxu0 0.0
    %1895 = vmatprep.subr.mxu0 0.0
    %1896 = vmatpush1.msra.mxu0 0.0
    %1897 = vmatprep.subr.mxu0 0.0
    %1898 = vmatpush1.msra.mxu0 0.0
    %1899 = vmatprep.subr.mxu0 0.0
    %1900 = vmatpush1.msra.mxu0 0.0
    %1901 = vmatprep.subr.mxu0 0.0
    %1902 = vmatpush1.msra.mxu0 0.0
    %1903 = vmatprep.subr.mxu0 0.0
    %1904 = vmatpush1.msra.mxu0 0.0
    %1905 = vmatprep.subr.mxu0 0.0
    %1906 = vmatpush1.msra.mxu0 0.0
    %1907 = vmatprep.subr.mxu0 0.0
    %1908 = vmatpush1.msra.mxu0 0.0
    %1909 = vmatprep.subr.mxu0 0.0
    %1910 = vmatpush1.msra.mxu0 0.0
    %1911 = vmatprep.subr.mxu0 0.0
    %1912 = vmatpush1.msra.mxu0 0.0
    %1913 = vmatprep.subr.mxu0 0.0
    %1914 = vmatpush1.msra.mxu0 0.0
    %1915 = vmatprep.subr.mxu0 0.0
    %1916 = vmatpush1.msra.mxu0 0.0
    %1917 = vmatprep.subr.mxu0 0.0
    %1918 = vmatpush1.msra.mxu0 0.0
    %1919 = vmatprep.subr.mxu0 0.0
    %1920 = vmatpush1.msra.mxu0 0.0
    %1921 = vmatprep.subr.mxu0 0.0
    %1922 = vmatpush1.msra.mxu0 0.0
    %1923 = vmatprep.subr.mxu0 0.0
    %1924 = vmatpush1.msra.mxu0 0.0
    %1925 = vmatprep.subr.mxu0 0.0
    %1926 = vmatpush1.msra.mxu0 0.0
    %1927 = vmatprep.subr.mxu0 0.0
    %1928 = vmatpush1.msra.mxu0 0.0
    %1929 = vmatprep.subr.mxu0 0.0
    %1930 = vmatpush1.msra.mxu0 0.0
    %1931 = vmatprep.subr.mxu0 0.0
    %1932 = vmatpush1.msra.mxu0 0.0
    %1933 = vmatprep.subr.mxu0 0.0
    %1934 = vmatpush1.msra.mxu0 0.0
    %1935 = vmatprep.subr.mxu0 0.0
    %1936 = vmatpush1.msra.mxu0 0.0
    %1937 = vmatprep.subr.mxu0 0.0
    %1938 = vmatpush1.msra.mxu0 0.0
    %1939 = vmatprep.subr.mxu0 0.0
    %1940 = vmatpush1.msra.mxu0 0.0
    %1941 = vmatprep.subr.mxu0 0.0
    %1942 = vmatpush1.msra.mxu0 0.0
    %1943 = vmatprep.subr.mxu0 0.0
    %1944 = vmatpush1.msra.mxu0 0.0
    %1945 = vmatprep.subr.mxu0 0.0
    %1946 = vmatpush1.msra.mxu0 0.0
    %1947 = vmatprep.subr.mxu0 0.0
    %1948 = vmatpush1.msra.mxu0 0.0
    %1949 = vmatprep.subr.mxu0 0.0
    %1950 = vmatpush1.msra.mxu0 0.0
    %1951 = vmatprep.mubr.f32.mxu0 0.0
    %1952 = vmatmul.mubr.f32.gmra.mrb[0].mxu0 %v1814
    %v1953 = vpop.f32.mrb[0].mxu0
    %v1954 = vadd.f32 %v1809, %v1953
    %v1955 = vpop.f32.mrb[0].mxu0
    %v1956 = vadd.f32 %v1811, %v1955
    %1957 = vdwg.mxu0
    %v1958 = vxor.u32 %v1883, 2147483648
    %v1959 = vmul.f32 %v1958, 1.442695
    %v1960 = vpow.pop %v1959
    %v1961 = vadd.f32 %v1960, 1.0
    %v1962 = vrcp.pop %v1961
    %v1963 = vmul.f32 1.0, %v1962
    %v1964 = vxor.u32 %v1885, 2147483648
    %v1965 = vmul.f32 %v1964, 1.442695
    %v1966 = vpow.pop %v1965
    %v1967 = vadd.f32 %v1966, 1.0
    %v1968 = vrcp.pop %v1967
    %v1969 = vmul.f32 1.0, %v1968
    %v1970 = vtanh.pop %v1954
    %v1971 = vxor.u32 %v1956, 2147483648
    %v1972 = vmul.f32 %v1971, 1.442695
    %v1973 = vpow.pop %v1972
    %v1974 = vadd.f32 %v1973, 1.0
    %v1975 = vrcp.pop %v1974
    %v1976 = vmul.f32 1.0, %v1975
    %v1977 = vmul.f32 %v1969, %v1666
    %v1978 = vmul.f32 %v1963, %v1970
    %v1979 = vadd.f32 %v1977, %v1978
    %v1980 = vtanh.pop %v1979
    %v1981 = vmul.f32 %v1976, %v1980
    %s1982 = scalar_lea.vmem %s0, 48
    %v1983 = vld [vmem:[%s1982] sm:$0xff]
    %1984 = vmatprep.subr.mxu0 %v35
    %1985 = vmatpush1.msra.mxu0 %v34
    %1986 = vmatprep.subr.mxu0 %v39
    %1987 = vmatpush1.msra.mxu0 %v38
    %1988 = vmatprep.subr.mxu0 %v43
    %1989 = vmatpush1.msra.mxu0 %v42
    %1990 = vmatprep.subr.mxu0 %v47
    %1991 = vmatpush1.msra.mxu0 %v46
    %1992 = vmatprep.subr.mxu0 %v51
    %1993 = vmatpush1.msra.mxu0 %v50
    %1994 = vmatprep.subr.mxu0 %v55
    %1995 = vmatpush1.msra.mxu0 %v54
    %1996 = vmatprep.subr.mxu0 %v59
    %1997 = vmatpush1.msra.mxu0 %v58
    %1998 = vmatprep.subr.mxu0 %v63
    %1999 = vmatpush1.msra.mxu0 %v62
    %2000 = vmatprep.subr.mxu0 %v67
    %2001 = vmatpush1.msra.mxu0 %v66
    %2002 = vmatprep.subr.mxu0 %v71
    %2003 = vmatpush1.msra.mxu0 %v70
    %2004 = vmatprep.subr.mxu0 %v75
    %2005 = vmatpush1.msra.mxu0 %v74
    %2006 = vmatprep.subr.mxu0 %v79
    %2007 = vmatpush1.msra.mxu0 %v78
    %2008 = vmatprep.subr.mxu0 %v83
    %2009 = vmatpush1.msra.mxu0 %v82
    %2010 = vmatprep.subr.mxu0 %v87
    %2011 = vmatpush1.msra.mxu0 %v86
    %2012 = vmatprep.subr.mxu0 %v91
    %2013 = vmatpush1.msra.mxu0 %v90
    %2014 = vmatprep.subr.mxu0 %v95
    %2015 = vmatpush1.msra.mxu0 %v94
    %2016 = vmatprep.subr.mxu0 0.0
    %2017 = vmatpush1.msra.mxu0 0.0
    %2018 = vmatprep.subr.mxu0 0.0
    %2019 = vmatpush1.msra.mxu0 0.0
    %2020 = vmatprep.subr.mxu0 0.0
    %2021 = vmatpush1.msra.mxu0 0.0
    %2022 = vmatprep.subr.mxu0 0.0
    %2023 = vmatpush1.msra.mxu0 0.0
    %2024 = vmatprep.subr.mxu0 0.0
    %2025 = vmatpush1.msra.mxu0 0.0
    %2026 = vmatprep.subr.mxu0 0.0
    %2027 = vmatpush1.msra.mxu0 0.0
    %2028 = vmatprep.subr.mxu0 0.0
    %2029 = vmatpush1.msra.mxu0 0.0
    %2030 = vmatprep.subr.mxu0 0.0
    %2031 = vmatpush1.msra.mxu0 0.0
    %2032 = vmatprep.subr.mxu0 0.0
    %2033 = vmatpush1.msra.mxu0 0.0
    %2034 = vmatprep.subr.mxu0 0.0
    %2035 = vmatpush1.msra.mxu0 0.0
    %2036 = vmatprep.subr.mxu0 0.0
    %2037 = vmatpush1.msra.mxu0 0.0
    %2038 = vmatprep.subr.mxu0 0.0
    %2039 = vmatpush1.msra.mxu0 0.0
    %2040 = vmatprep.subr.mxu0 0.0
    %2041 = vmatpush1.msra.mxu0 0.0
    %2042 = vmatprep.subr.mxu0 0.0
    %2043 = vmatpush1.msra.mxu0 0.0
    %2044 = vmatprep.subr.mxu0 0.0
    %2045 = vmatpush1.msra.mxu0 0.0
    %2046 = vmatprep.subr.mxu0 0.0
    %2047 = vmatpush1.msra.mxu0 0.0
    %2048 = vmatprep.mubr.f32.mxu0 0.0
    %2049 = vmatmul.mubr.f32.gmra.mrb[0].mxu0 %v1981
    %v2050 = vpop.f32.mrb[0].mxu0
    %v2051 = vadd.f32 0.0, %v2050
    %v2052 = vpop.f32.mrb[0].mxu0
    %v2053 = vadd.f32 0.0, %v2052
    %2054 = vdwg.mxu0
    %2055 = vmatprep.subr.mxu0 %v37
    %2056 = vmatpush1.msra.mxu0 %v36
    %2057 = vmatprep.subr.mxu0 %v41
    %2058 = vmatpush1.msra.mxu0 %v40
    %2059 = vmatprep.subr.mxu0 %v45
    %2060 = vmatpush1.msra.mxu0 %v44
    %2061 = vmatprep.subr.mxu0 %v49
    %2062 = vmatpush1.msra.mxu0 %v48
    %2063 = vmatprep.subr.mxu0 %v53
    %2064 = vmatpush1.msra.mxu0 %v52
    %2065 = vmatprep.subr.mxu0 %v57
    %2066 = vmatpush1.msra.mxu0 %v56
    %2067 = vmatprep.subr.mxu0 %v61
    %2068 = vmatpush1.msra.mxu0 %v60
    %2069 = vmatprep.subr.mxu0 %v65
    %2070 = vmatpush1.msra.mxu0 %v64
    %2071 = vmatprep.subr.mxu0 %v69
    %2072 = vmatpush1.msra.mxu0 %v68
    %2073 = vmatprep.subr.mxu0 %v73
    %2074 = vmatpush1.msra.mxu0 %v72
    %2075 = vmatprep.subr.mxu0 %v77
    %2076 = vmatpush1.msra.mxu0 %v76
    %2077 = vmatprep.subr.mxu0 %v81
    %2078 = vmatpush1.msra.mxu0 %v80
    %2079 = vmatprep.subr.mxu0 %v85
    %2080 = vmatpush1.msra.mxu0 %v84
    %2081 = vmatprep.subr.mxu0 %v89
    %2082 = vmatpush1.msra.mxu0 %v88
    %2083 = vmatprep.subr.mxu0 %v93
    %2084 = vmatpush1.msra.mxu0 %v92
    %2085 = vmatprep.subr.mxu0 %v97
    %2086 = vmatpush1.msra.mxu0 %v96
    %2087 = vmatprep.subr.mxu0 0.0
    %2088 = vmatpush1.msra.mxu0 0.0
    %2089 = vmatprep.subr.mxu0 0.0
    %2090 = vmatpush1.msra.mxu0 0.0
    %2091 = vmatprep.subr.mxu0 0.0
    %2092 = vmatpush1.msra.mxu0 0.0
    %2093 = vmatprep.subr.mxu0 0.0
    %2094 = vmatpush1.msra.mxu0 0.0
    %2095 = vmatprep.subr.mxu0 0.0
    %2096 = vmatpush1.msra.mxu0 0.0
    %2097 = vmatprep.subr.mxu0 0.0
    %2098 = vmatpush1.msra.mxu0 0.0
    %2099 = vmatprep.subr.mxu0 0.0
    %2100 = vmatpush1.msra.mxu0 0.0
    %2101 = vmatprep.subr.mxu0 0.0
    %2102 = vmatpush1.msra.mxu0 0.0
    %2103 = vmatprep.subr.mxu0 0.0
    %2104 = vmatpush1.msra.mxu0 0.0
    %2105 = vmatprep.subr.mxu0 0.0
    %2106 = vmatpush1.msra.mxu0 0.0
    %2107 = vmatprep.subr.mxu0 0.0
    %2108 = vmatpush1.msra.mxu0 0.0
    %2109 = vmatprep.subr.mxu0 0.0
    %2110 = vmatpush1.msra.mxu0 0.0
    %2111 = vmatprep.subr.mxu0 0.0
    %2112 = vmatpush1.msra.mxu0 0.0
    %2113 = vmatprep.subr.mxu0 0.0
    %2114 = vmatpush1.msra.mxu0 0.0
    %2115 = vmatprep.subr.mxu0 0.0
    %2116 = vmatpush1.msra.mxu0 0.0
    %2117 = vmatprep.subr.mxu0 0.0
    %2118 = vmatpush1.msra.mxu0 0.0
    %2119 = vmatprep.mubr.f32.mxu0 0.0
    %2120 = vmatmul.mubr.f32.gmra.mrb[0].mxu0 %v1981
    %v2121 = vpop.f32.mrb[0].mxu0
    %v2122 = vadd.f32 0.0, %v2121
    %v2123 = vpop.f32.mrb[0].mxu0
    %v2124 = vadd.f32 0.0, %v2123
    %2125 = vdwg.mxu0
    %v2127 = vsel %vm247, %v1983, 0
    %2129 = vmatprep.subr.mxu0 %v99
    %2130 = vmatpush1.msra.mxu0 %v98
    %2131 = vmatprep.subr.mxu0 0.0
    %2132 = vmatpush1.msra.mxu0 0.0
    %2133 = vmatprep.subr.mxu0 0.0
    %2134 = vmatpush1.msra.mxu0 0.0
    %2135 = vmatprep.subr.mxu0 0.0
    %2136 = vmatpush1.msra.mxu0 0.0
    %2137 = vmatprep.subr.mxu0 0.0
    %2138 = vmatpush1.msra.mxu0 0.0
    %2139 = vmatprep.subr.mxu0 0.0
    %2140 = vmatpush1.msra.mxu0 0.0
    %2141 = vmatprep.subr.mxu0 0.0
    %2142 = vmatpush1.msra.mxu0 0.0
    %2143 = vmatprep.subr.mxu0 0.0
    %2144 = vmatpush1.msra.mxu0 0.0
    %2145 = vmatprep.subr.mxu0 0.0
    %2146 = vmatpush1.msra.mxu0 0.0
    %2147 = vmatprep.subr.mxu0 0.0
    %2148 = vmatpush1.msra.mxu0 0.0
    %2149 = vmatprep.subr.mxu0 0.0
    %2150 = vmatpush1.msra.mxu0 0.0
    %2151 = vmatprep.subr.mxu0 0.0
    %2152 = vmatpush1.msra.mxu0 0.0
    %2153 = vmatprep.subr.mxu0 0.0
    %2154 = vmatpush1.msra.mxu0 0.0
    %2155 = vmatprep.subr.mxu0 0.0
    %2156 = vmatpush1.msra.mxu0 0.0
    %2157 = vmatprep.subr.mxu0 0.0
    %2158 = vmatpush1.msra.mxu0 0.0
    %2159 = vmatprep.subr.mxu0 0.0
    %2160 = vmatpush1.msra.mxu0 0.0
    %2161 = vmatprep.subr.mxu0 0.0
    %2162 = vmatpush1.msra.mxu0 0.0
    %2163 = vmatprep.subr.mxu0 0.0
    %2164 = vmatpush1.msra.mxu0 0.0
    %2165 = vmatprep.subr.mxu0 0.0
    %2166 = vmatpush1.msra.mxu0 0.0
    %2167 = vmatprep.subr.mxu0 0.0
    %2168 = vmatpush1.msra.mxu0 0.0
    %2169 = vmatprep.subr.mxu0 0.0
    %2170 = vmatpush1.msra.mxu0 0.0
    %2171 = vmatprep.subr.mxu0 0.0
    %2172 = vmatpush1.msra.mxu0 0.0
    %2173 = vmatprep.subr.mxu0 0.0
    %2174 = vmatpush1.msra.mxu0 0.0
    %2175 = vmatprep.subr.mxu0 0.0
    %2176 = vmatpush1.msra.mxu0 0.0
    %2177 = vmatprep.subr.mxu0 0.0
    %2178 = vmatpush1.msra.mxu0 0.0
    %2179 = vmatprep.subr.mxu0 0.0
    %2180 = vmatpush1.msra.mxu0 0.0
    %2181 = vmatprep.subr.mxu0 0.0
    %2182 = vmatpush1.msra.mxu0 0.0
    %2183 = vmatprep.subr.mxu0 0.0
    %2184 = vmatpush1.msra.mxu0 0.0
    %2185 = vmatprep.subr.mxu0 0.0
    %2186 = vmatpush1.msra.mxu0 0.0
    %2187 = vmatprep.subr.mxu0 0.0
    %2188 = vmatpush1.msra.mxu0 0.0
    %2189 = vmatprep.subr.mxu0 0.0
    %2190 = vmatpush1.msra.mxu0 0.0
    %2191 = vmatprep.subr.mxu0 0.0
    %2192 = vmatpush1.msra.mxu0 0.0
    %2193 = vmatprep.mubr.f32.mxu0 0.0
    %2194 = vmatmul.mubr.f32.gmra.mrb[0].mxu0 %v2127
    %v2195 = vpop.f32.mrb[0].mxu0
    %v2196 = vadd.f32 %v2051, %v2195
    %v2197 = vpop.f32.mrb[0].mxu0
    %v2198 = vadd.f32 %v2053, %v2197
    %2199 = vdwg.mxu0
    %2200 = vmatprep.subr.mxu0 %v101
    %2201 = vmatpush1.msra.mxu0 %v100
    %2202 = vmatprep.subr.mxu0 0.0
    %2203 = vmatpush1.msra.mxu0 0.0
    %2204 = vmatprep.subr.mxu0 0.0
    %2205 = vmatpush1.msra.mxu0 0.0
    %2206 = vmatprep.subr.mxu0 0.0
    %2207 = vmatpush1.msra.mxu0 0.0
    %2208 = vmatprep.subr.mxu0 0.0
    %2209 = vmatpush1.msra.mxu0 0.0
    %2210 = vmatprep.subr.mxu0 0.0
    %2211 = vmatpush1.msra.mxu0 0.0
    %2212 = vmatprep.subr.mxu0 0.0
    %2213 = vmatpush1.msra.mxu0 0.0
    %2214 = vmatprep.subr.mxu0 0.0
    %2215 = vmatpush1.msra.mxu0 0.0
    %2216 = vmatprep.subr.mxu0 0.0
    %2217 = vmatpush1.msra.mxu0 0.0
    %2218 = vmatprep.subr.mxu0 0.0
    %2219 = vmatpush1.msra.mxu0 0.0
    %2220 = vmatprep.subr.mxu0 0.0
    %2221 = vmatpush1.msra.mxu0 0.0
    %2222 = vmatprep.subr.mxu0 0.0
    %2223 = vmatpush1.msra.mxu0 0.0
    %2224 = vmatprep.subr.mxu0 0.0
    %2225 = vmatpush1.msra.mxu0 0.0
    %2226 = vmatprep.subr.mxu0 0.0
    %2227 = vmatpush1.msra.mxu0 0.0
    %2228 = vmatprep.subr.mxu0 0.0
    %2229 = vmatpush1.msra.mxu0 0.0
    %2230 = vmatprep.subr.mxu0 0.0
    %2231 = vmatpush1.msra.mxu0 0.0
    %2232 = vmatprep.subr.mxu0 0.0
    %2233 = vmatpush1.msra.mxu0 0.0
    %2234 = vmatprep.subr.mxu0 0.0
    %2235 = vmatpush1.msra.mxu0 0.0
    %2236 = vmatprep.subr.mxu0 0.0
    %2237 = vmatpush1.msra.mxu0 0.0
    %2238 = vmatprep.subr.mxu0 0.0
    %2239 = vmatpush1.msra.mxu0 0.0
    %2240 = vmatprep.subr.mxu0 0.0
    %2241 = vmatpush1.msra.mxu0 0.0
    %2242 = vmatprep.subr.mxu0 0.0
    %2243 = vmatpush1.msra.mxu0 0.0
    %2244 = vmatprep.subr.mxu0 0.0
    %2245 = vmatpush1.msra.mxu0 0.0
    %2246 = vmatprep.subr.mxu0 0.0
    %2247 = vmatpush1.msra.mxu0 0.0
    %2248 = vmatprep.subr.mxu0 0.0
    %2249 = vmatpush1.msra.mxu0 0.0
    %2250 = vmatprep.subr.mxu0 0.0
    %2251 = vmatpush1.msra.mxu0 0.0
    %2252 = vmatprep.subr.mxu0 0.0
    %2253 = vmatpush1.msra.mxu0 0.0
    %2254 = vmatprep.subr.mxu0 0.0
    %2255 = vmatpush1.msra.mxu0 0.0
    %2256 = vmatprep.subr.mxu0 0.0
    %2257 = vmatpush1.msra.mxu0 0.0
    %2258 = vmatprep.subr.mxu0 0.0
    %2259 = vmatpush1.msra.mxu0 0.0
    %2260 = vmatprep.subr.mxu0 0.0
    %2261 = vmatpush1.msra.mxu0 0.0
    %2262 = vmatprep.subr.mxu0 0.0
    %2263 = vmatpush1.msra.mxu0 0.0
    %2264 = vmatprep.mubr.f32.mxu0 0.0
    %2265 = vmatmul.mubr.f32.gmra.mrb[0].mxu0 %v2127
    %v2266 = vpop.f32.mrb[0].mxu0
    %v2267 = vadd.f32 %v2122, %v2266
    %v2268 = vpop.f32.mrb[0].mxu0
    %v2269 = vadd.f32 %v2124, %v2268
    %2270 = vdwg.mxu0
    %v2271 = vxor.u32 %v2196, 2147483648
    %v2272 = vmul.f32 %v2271, 1.442695
    %v2273 = vpow.pop %v2272
    %v2274 = vadd.f32 %v2273, 1.0
    %v2275 = vrcp.pop %v2274
    %v2276 = vmul.f32 1.0, %v2275
    %v2277 = vxor.u32 %v2198, 2147483648
    %v2278 = vmul.f32 %v2277, 1.442695
    %v2279 = vpow.pop %v2278
    %v2280 = vadd.f32 %v2279, 1.0
    %v2281 = vrcp.pop %v2280
    %v2282 = vmul.f32 1.0, %v2281
    %v2283 = vtanh.pop %v2267
    %v2284 = vxor.u32 %v2269, 2147483648
    %v2285 = vmul.f32 %v2284, 1.442695
    %v2286 = vpow.pop %v2285
    %v2287 = vadd.f32 %v2286, 1.0
    %v2288 = vrcp.pop %v2287
    %v2289 = vmul.f32 1.0, %v2288
    %v2290 = vmul.f32 %v2282, %v1979
    %v2291 = vmul.f32 %v2276, %v2283
    %v2292 = vadd.f32 %v2290, %v2291
    %v2293 = vtanh.pop %v2292
    %v2294 = vmul.f32 %v2289, %v2293
    %s2295 = scalar_lea.vmem %s0, 56
    %v2296 = vld [vmem:[%s2295] sm:$0xff]
    %2297 = vmatprep.subr.mxu0 %v35
    %2298 = vmatpush1.msra.mxu0 %v34
    %2299 = vmatprep.subr.mxu0 %v39
    %2300 = vmatpush1.msra.mxu0 %v38
    %2301 = vmatprep.subr.mxu0 %v43
    %2302 = vmatpush1.msra.mxu0 %v42
    %2303 = vmatprep.subr.mxu0 %v47
    %2304 = vmatpush1.msra.mxu0 %v46
    %2305 = vmatprep.subr.mxu0 %v51
    %2306 = vmatpush1.msra.mxu0 %v50
    %2307 = vmatprep.subr.mxu0 %v55
    %2308 = vmatpush1.msra.mxu0 %v54
    %2309 = vmatprep.subr.mxu0 %v59
    %2310 = vmatpush1.msra.mxu0 %v58
    %2311 = vmatprep.subr.mxu0 %v63
    %2312 = vmatpush1.msra.mxu0 %v62
    %2313 = vmatprep.subr.mxu0 %v67
    %2314 = vmatpush1.msra.mxu0 %v66
    %2315 = vmatprep.subr.mxu0 %v71
    %2316 = vmatpush1.msra.mxu0 %v70
    %2317 = vmatprep.subr.mxu0 %v75
    %2318 = vmatpush1.msra.mxu0 %v74
    %2319 = vmatprep.subr.mxu0 %v79
    %2320 = vmatpush1.msra.mxu0 %v78
    %2321 = vmatprep.subr.mxu0 %v83
    %2322 = vmatpush1.msra.mxu0 %v82
    %2323 = vmatprep.subr.mxu0 %v87
    %2324 = vmatpush1.msra.mxu0 %v86
    %2325 = vmatprep.subr.mxu0 %v91
    %2326 = vmatpush1.msra.mxu0 %v90
    %2327 = vmatprep.subr.mxu0 %v95
    %2328 = vmatpush1.msra.mxu0 %v94
    %2329 = vmatprep.subr.mxu0 0.0
    %2330 = vmatpush1.msra.mxu0 0.0
    %2331 = vmatprep.subr.mxu0 0.0
    %2332 = vmatpush1.msra.mxu0 0.0
    %2333 = vmatprep.subr.mxu0 0.0
    %2334 = vmatpush1.msra.mxu0 0.0
    %2335 = vmatprep.subr.mxu0 0.0
    %2336 = vmatpush1.msra.mxu0 0.0
    %2337 = vmatprep.subr.mxu0 0.0
    %2338 = vmatpush1.msra.mxu0 0.0
    %2339 = vmatprep.subr.mxu0 0.0
    %2340 = vmatpush1.msra.mxu0 0.0
    %2341 = vmatprep.subr.mxu0 0.0
    %2342 = vmatpush1.msra.mxu0 0.0
    %2343 = vmatprep.subr.mxu0 0.0
    %2344 = vmatpush1.msra.mxu0 0.0
    %2345 = vmatprep.subr.mxu0 0.0
    %2346 = vmatpush1.msra.mxu0 0.0
    %2347 = vmatprep.subr.mxu0 0.0
    %2348 = vmatpush1.msra.mxu0 0.0
    %2349 = vmatprep.subr.mxu0 0.0
    %2350 = vmatpush1.msra.mxu0 0.0
    %2351 = vmatprep.subr.mxu0 0.0
    %2352 = vmatpush1.msra.mxu0 0.0
    %2353 = vmatprep.subr.mxu0 0.0
    %2354 = vmatpush1.msra.mxu0 0.0
    %2355 = vmatprep.subr.mxu0 0.0
    %2356 = vmatpush1.msra.mxu0 0.0
    %2357 = vmatprep.subr.mxu0 0.0
    %2358 = vmatpush1.msra.mxu0 0.0
    %2359 = vmatprep.subr.mxu0 0.0
    %2360 = vmatpush1.msra.mxu0 0.0
    %2361 = vmatprep.mubr.f32.mxu0 0.0
    %2362 = vmatmul.mubr.f32.gmra.mrb[0].mxu0 %v2294
    %v2363 = vpop.f32.mrb[0].mxu0
    %v2364 = vadd.f32 0.0, %v2363
    %v2365 = vpop.f32.mrb[0].mxu0
    %v2366 = vadd.f32 0.0, %v2365
    %2367 = vdwg.mxu0
    %2368 = vmatprep.subr.mxu0 %v37
    %2369 = vmatpush1.msra.mxu0 %v36
    %2370 = vmatprep.subr.mxu0 %v41
    %2371 = vmatpush1.msra.mxu0 %v40
    %2372 = vmatprep.subr.mxu0 %v45
    %2373 = vmatpush1.msra.mxu0 %v44
    %2374 = vmatprep.subr.mxu0 %v49
    %2375 = vmatpush1.msra.mxu0 %v48
    %2376 = vmatprep.subr.mxu0 %v53
    %2377 = vmatpush1.msra.mxu0 %v52
    %2378 = vmatprep.subr.mxu0 %v57
    %2379 = vmatpush1.msra.mxu0 %v56
    %2380 = vmatprep.subr.mxu0 %v61
    %2381 = vmatpush1.msra.mxu0 %v60
    %2382 = vmatprep.subr.mxu0 %v65
    %2383 = vmatpush1.msra.mxu0 %v64
    %2384 = vmatprep.subr.mxu0 %v69
    %2385 = vmatpush1.msra.mxu0 %v68
    %2386 = vmatprep.subr.mxu0 %v73
    %2387 = vmatpush1.msra.mxu0 %v72
    %2388 = vmatprep.subr.mxu0 %v77
    %2389 = vmatpush1.msra.mxu0 %v76
    %2390 = vmatprep.subr.mxu0 %v81
    %2391 = vmatpush1.msra.mxu0 %v80
    %2392 = vmatprep.subr.mxu0 %v85
    %2393 = vmatpush1.msra.mxu0 %v84
    %2394 = vmatprep.subr.mxu0 %v89
    %2395 = vmatpush1.msra.mxu0 %v88
    %2396 = vmatprep.subr.mxu0 %v93
    %2397 = vmatpush1.msra.mxu0 %v92
    %2398 = vmatprep.subr.mxu0 %v97
    %2399 = vmatpush1.msra.mxu0 %v96
    %2400 = vmatprep.subr.mxu0 0.0
    %2401 = vmatpush1.msra.mxu0 0.0
    %2402 = vmatprep.subr.mxu0 0.0
    %2403 = vmatpush1.msra.mxu0 0.0
    %2404 = vmatprep.subr.mxu0 0.0
    %2405 = vmatpush1.msra.mxu0 0.0
    %2406 = vmatprep.subr.mxu0 0.0
    %2407 = vmatpush1.msra.mxu0 0.0
    %2408 = vmatprep.subr.mxu0 0.0
    %2409 = vmatpush1.msra.mxu0 0.0
    %2410 = vmatprep.subr.mxu0 0.0
    %2411 = vmatpush1.msra.mxu0 0.0
    %2412 = vmatprep.subr.mxu0 0.0
    %2413 = vmatpush1.msra.mxu0 0.0
    %2414 = vmatprep.subr.mxu0 0.0
    %2415 = vmatpush1.msra.mxu0 0.0
    %2416 = vmatprep.subr.mxu0 0.0
    %2417 = vmatpush1.msra.mxu0 0.0
    %2418 = vmatprep.subr.mxu0 0.0
    %2419 = vmatpush1.msra.mxu0 0.0
    %2420 = vmatprep.subr.mxu0 0.0
    %2421 = vmatpush1.msra.mxu0 0.0
    %2422 = vmatprep.subr.mxu0 0.0
    %2423 = vmatpush1.msra.mxu0 0.0
    %2424 = vmatprep.subr.mxu0 0.0
    %2425 = vmatpush1.msra.mxu0 0.0
    %2426 = vmatprep.subr.mxu0 0.0
    %2427 = vmatpush1.msra.mxu0 0.0
    %2428 = vmatprep.subr.mxu0 0.0
    %2429 = vmatpush1.msra.mxu0 0.0
    %2430 = vmatprep.subr.mxu0 0.0
    %2431 = vmatpush1.msra.mxu0 0.0
    %2432 = vmatprep.mubr.f32.mxu0 0.0
    %2433 = vmatmul.mubr.f32.gmra.mrb[0].mxu0 %v2294
    %v2434 = vpop.f32.mrb[0].mxu0
    %v2435 = vadd.f32 0.0, %v2434
    %v2436 = vpop.f32.mrb[0].mxu0
    %v2437 = vadd.f32 0.0, %v2436
    %2438 = vdwg.mxu0
    %v2440 = vsel %vm247, %v2296, 0
    %2442 = vmatprep.subr.mxu0 %v99
    %2443 = vmatpush1.msra.mxu0 %v98
    %2444 = vmatprep.subr.mxu0 0.0
    %2445 = vmatpush1.msra.mxu0 0.0
    %2446 = vmatprep.subr.mxu0 0.0
    %2447 = vmatpush1.msra.mxu0 0.0
    %2448 = vmatprep.subr.mxu0 0.0
    %2449 = vmatpush1.msra.mxu0 0.0
    %2450 = vmatprep.subr.mxu0 0.0
    %2451 = vmatpush1.msra.mxu0 0.0
    %2452 = vmatprep.subr.mxu0 0.0
    %2453 = vmatpush1.msra.mxu0 0.0
    %2454 = vmatprep.subr.mxu0 0.0
    %2455 = vmatpush1.msra.mxu0 0.0
    %2456 = vmatprep.subr.mxu0 0.0
    %2457 = vmatpush1.msra.mxu0 0.0
    %2458 = vmatprep.subr.mxu0 0.0
    %2459 = vmatpush1.msra.mxu0 0.0
    %2460 = vmatprep.subr.mxu0 0.0
    %2461 = vmatpush1.msra.mxu0 0.0
    %2462 = vmatprep.subr.mxu0 0.0
    %2463 = vmatpush1.msra.mxu0 0.0
    %2464 = vmatprep.subr.mxu0 0.0
    %2465 = vmatpush1.msra.mxu0 0.0
    %2466 = vmatprep.subr.mxu0 0.0
    %2467 = vmatpush1.msra.mxu0 0.0
    %2468 = vmatprep.subr.mxu0 0.0
    %2469 = vmatpush1.msra.mxu0 0.0
    %2470 = vmatprep.subr.mxu0 0.0
    %2471 = vmatpush1.msra.mxu0 0.0
    %2472 = vmatprep.subr.mxu0 0.0
    %2473 = vmatpush1.msra.mxu0 0.0
    %2474 = vmatprep.subr.mxu0 0.0
    %2475 = vmatpush1.msra.mxu0 0.0
    %2476 = vmatprep.subr.mxu0 0.0
    %2477 = vmatpush1.msra.mxu0 0.0
    %2478 = vmatprep.subr.mxu0 0.0
    %2479 = vmatpush1.msra.mxu0 0.0
    %2480 = vmatprep.subr.mxu0 0.0
    %2481 = vmatpush1.msra.mxu0 0.0
    %2482 = vmatprep.subr.mxu0 0.0
    %2483 = vmatpush1.msra.mxu0 0.0
    %2484 = vmatprep.subr.mxu0 0.0
    %2485 = vmatpush1.msra.mxu0 0.0
    %2486 = vmatprep.subr.mxu0 0.0
    %2487 = vmatpush1.msra.mxu0 0.0
    %2488 = vmatprep.subr.mxu0 0.0
    %2489 = vmatpush1.msra.mxu0 0.0
    %2490 = vmatprep.subr.mxu0 0.0
    %2491 = vmatpush1.msra.mxu0 0.0
    %2492 = vmatprep.subr.mxu0 0.0
    %2493 = vmatpush1.msra.mxu0 0.0
    %2494 = vmatprep.subr.mxu0 0.0
    %2495 = vmatpush1.msra.mxu0 0.0
    %2496 = vmatprep.subr.mxu0 0.0
    %2497 = vmatpush1.msra.mxu0 0.0
    %2498 = vmatprep.subr.mxu0 0.0
    %2499 = vmatpush1.msra.mxu0 0.0
    %2500 = vmatprep.subr.mxu0 0.0
    %2501 = vmatpush1.msra.mxu0 0.0
    %2502 = vmatprep.subr.mxu0 0.0
    %2503 = vmatpush1.msra.mxu0 0.0
    %2504 = vmatprep.subr.mxu0 0.0
    %2505 = vmatpush1.msra.mxu0 0.0
    %2506 = vmatprep.mubr.f32.mxu0 0.0
    %2507 = vmatmul.mubr.f32.gmra.mrb[0].mxu0 %v2440
    %v2508 = vpop.f32.mrb[0].mxu0
    %v2509 = vadd.f32 %v2364, %v2508
    %v2510 = vpop.f32.mrb[0].mxu0
    %v2511 = vadd.f32 %v2366, %v2510
    %2512 = vdwg.mxu0
    %2513 = vmatprep.subr.mxu0 %v101
    %2514 = vmatpush1.msra.mxu0 %v100
    %2515 = vmatprep.subr.mxu0 0.0
    %2516 = vmatpush1.msra.mxu0 0.0
    %2517 = vmatprep.subr.mxu0 0.0
    %2518 = vmatpush1.msra.mxu0 0.0
    %2519 = vmatprep.subr.mxu0 0.0
    %2520 = vmatpush1.msra.mxu0 0.0
    %2521 = vmatprep.subr.mxu0 0.0
    %2522 = vmatpush1.msra.mxu0 0.0
    %2523 = vmatprep.subr.mxu0 0.0
    %2524 = vmatpush1.msra.mxu0 0.0
    %2525 = vmatprep.subr.mxu0 0.0
    %2526 = vmatpush1.msra.mxu0 0.0
    %2527 = vmatprep.subr.mxu0 0.0
    %2528 = vmatpush1.msra.mxu0 0.0
    %2529 = vmatprep.subr.mxu0 0.0
    %2530 = vmatpush1.msra.mxu0 0.0
    %2531 = vmatprep.subr.mxu0 0.0
    %2532 = vmatpush1.msra.mxu0 0.0
    %2533 = vmatprep.subr.mxu0 0.0
    %2534 = vmatpush1.msra.mxu0 0.0
    %2535 = vmatprep.subr.mxu0 0.0
    %2536 = vmatpush1.msra.mxu0 0.0
    %2537 = vmatprep.subr.mxu0 0.0
    %2538 = vmatpush1.msra.mxu0 0.0
    %2539 = vmatprep.subr.mxu0 0.0
    %2540 = vmatpush1.msra.mxu0 0.0
    %2541 = vmatprep.subr.mxu0 0.0
    %2542 = vmatpush1.msra.mxu0 0.0
    %2543 = vmatprep.subr.mxu0 0.0
    %2544 = vmatpush1.msra.mxu0 0.0
    %2545 = vmatprep.subr.mxu0 0.0
    %2546 = vmatpush1.msra.mxu0 0.0
    %2547 = vmatprep.subr.mxu0 0.0
    %2548 = vmatpush1.msra.mxu0 0.0
    %2549 = vmatprep.subr.mxu0 0.0
    %2550 = vmatpush1.msra.mxu0 0.0
    %2551 = vmatprep.subr.mxu0 0.0
    %2552 = vmatpush1.msra.mxu0 0.0
    %2553 = vmatprep.subr.mxu0 0.0
    %2554 = vmatpush1.msra.mxu0 0.0
    %2555 = vmatprep.subr.mxu0 0.0
    %2556 = vmatpush1.msra.mxu0 0.0
    %2557 = vmatprep.subr.mxu0 0.0
    %2558 = vmatpush1.msra.mxu0 0.0
    %2559 = vmatprep.subr.mxu0 0.0
    %2560 = vmatpush1.msra.mxu0 0.0
    %2561 = vmatprep.subr.mxu0 0.0
    %2562 = vmatpush1.msra.mxu0 0.0
    %2563 = vmatprep.subr.mxu0 0.0
    %2564 = vmatpush1.msra.mxu0 0.0
    %2565 = vmatprep.subr.mxu0 0.0
    %2566 = vmatpush1.msra.mxu0 0.0
    %2567 = vmatprep.subr.mxu0 0.0
    %2568 = vmatpush1.msra.mxu0 0.0
    %2569 = vmatprep.subr.mxu0 0.0
    %2570 = vmatpush1.msra.mxu0 0.0
    %2571 = vmatprep.subr.mxu0 0.0
    %2572 = vmatpush1.msra.mxu0 0.0
    %2573 = vmatprep.subr.mxu0 0.0
    %2574 = vmatpush1.msra.mxu0 0.0
    %2575 = vmatprep.subr.mxu0 0.0
    %2576 = vmatpush1.msra.mxu0 0.0
    %2577 = vmatprep.mubr.f32.mxu0 0.0
    %2578 = vmatmul.mubr.f32.gmra.mrb[0].mxu0 %v2440
    %v2579 = vpop.f32.mrb[0].mxu0
    %v2580 = vadd.f32 %v2435, %v2579
    %v2581 = vpop.f32.mrb[0].mxu0
    %v2582 = vadd.f32 %v2437, %v2581
    %2583 = vdwg.mxu0
    %v2584 = vxor.u32 %v2509, 2147483648
    %v2585 = vmul.f32 %v2584, 1.442695
    %v2586 = vpow.pop %v2585
    %v2587 = vadd.f32 %v2586, 1.0
    %v2588 = vrcp.pop %v2587
    %v2589 = vmul.f32 1.0, %v2588
    %v2590 = vxor.u32 %v2511, 2147483648
    %v2591 = vmul.f32 %v2590, 1.442695
    %v2592 = vpow.pop %v2591
    %v2593 = vadd.f32 %v2592, 1.0
    %v2594 = vrcp.pop %v2593
    %v2595 = vmul.f32 1.0, %v2594
    %v2596 = vtanh.pop %v2580
    %v2597 = vxor.u32 %v2582, 2147483648
    %v2598 = vmul.f32 %v2597, 1.442695
    %v2599 = vpow.pop %v2598
    %v2600 = vadd.f32 %v2599, 1.0
    %v2601 = vrcp.pop %v2600
    %v2602 = vmul.f32 1.0, %v2601
    %v2603 = vmul.f32 %v2595, %v2292
    %v2604 = vmul.f32 %v2589, %v2596
    %v2605 = vadd.f32 %v2603, %v2604
    %v2606 = vtanh.pop %v2605
    %v2607 = vmul.f32 %v2602, %v2606
    %2608 = vst [vmem:[#allocation2] sm:$0xff] %v2607
    %2609 = vst [vmem:[#allocation3] sm:$0xff] %v2605
    // Predicated region
    $region22: #{lstm_model_forward.1} parent=1 // pred_check
      %p2610 = pneg %p28
    $region23: #{lstm_model_forward.1} parent=1 // pred_check_branch
      %2612 = sbr.rel (%p2610) target = $region25
    $region24: #{lstm_model_forward.1} parent=1 // pred_region
      %2613 = vst [vmem:[%s3] sm:$0xff] %v2607
    $region25: #{lstm_model_forward.1} parent=1 // pred_fallthru
      _
    // Predicated region
    $region26: #{lstm_model_forward.1} parent=1 // pred_check
      _
    $region27: #{lstm_model_forward.1} parent=1 // pred_check_branch
      %2615 = sbr.rel (0) target = $region29
    $region28: #{lstm_model_forward.1} parent=1 // pred_region
      _
    $region29: #{lstm_model_forward.1} parent=1 // pred_fallthru
      _
    // Predicated region
    $region30: #{lstm_model_forward.1} parent=1 // pred_check
      _
    $region31: #{lstm_model_forward.1} parent=1 // pred_check_branch
      %2617 = sbr.rel (0) target = $region33
    $region32: #{lstm_model_forward.1} parent=1 // pred_region
      _
    $region33: #{lstm_model_forward.1} parent=1 // pred_fallthru
      _
    %2618 = vsyncpa [#allocation5], 1

</llo_original>
